<compile_context>
chip_gen: v7x
topology: tpu7x:2x2x1
jax: 0.10.0
libtpu: 0.0.40
codegen_flags: <defaults>
</compile_context>

<pallas_src>
import jax
import jax.numpy as jnp
from jax.experimental import pallas as pl
from jax.experimental.pallas import tpu as pltpu


def pointer_network_kernel(tok_ref, op_ref,
                           wigo_ref, bigo_ref,
                           wdec_ref, wenc_ref, bencdec_ref,
                           wref_ref, bref_ref,
                           probs_ref, peaks_ref):
    BT, N, E = tok_ref.shape          # batch tile, n_tokens, embedding_dim
    T = probs_ref.shape[1]            # num_operands

    # ---- loop-invariant loads / precompute (hoisted out of the serial T loop) ----
    tok = tok_ref[...]                                   # (BT, N, E)
    tok_flat = tok.reshape(BT * N, E)                    # rows for the encoder projection
    w_igo, b_igo = wigo_ref[...], bigo_ref[...]          # (E, 3E), (1, 3E)
    w_dec = wdec_ref[...]                                # (E, E)
    w_ref = wref_ref[...].reshape(1, 1, E)               # kept small; lane-broadcasts per-vreg
    b_ref = bref_ref[...]                                # (1, 1), broadcasts against (BT, N)

    # encoder_weights(token_embeddings) + folded b_dec: identical every step -> compute once.
    enc = (jnp.dot(tok_flat, wenc_ref[...], preferred_element_type=jnp.float32)
           + bencdec_ref[...]).reshape(BT, N, E)         # (BT, N, E)

    n_iota = jax.lax.broadcasted_iota(jnp.int32, (BT, N), 1)   # token index per lane

    dec_in = op_ref[...]                                 # (BT, E)
    logp_steps = []
    pk_steps = []

    for t in range(T):                                   # num_operands: static, unrolled
        # --- LSTMCell with zero hidden/cell state: one fused (E, 3E) gate matmul ---
        # (forget gate is dead since c_prev == 0; its weights/bias are never passed in)
        gates = jnp.dot(dec_in, w_igo, preferred_element_type=jnp.float32) + b_igo   # (BT, 3E)
        i_g = jax.nn.sigmoid(gates[:, 0 * E:1 * E])
        g_g = jnp.tanh(gates[:, 1 * E:2 * E])
        o_g = jax.nn.sigmoid(gates[:, 2 * E:3 * E])
        hx = o_g * jnp.tanh(i_g * g_g)                   # (BT, E); dropout: eval -> identity

        # --- additive attention + log_softmax over tokens ---
        dq = jnp.dot(hx, w_dec, preferred_element_type=jnp.float32)    # (BT, E); b_dec in enc
        comp = jnp.tanh(dq[:, None, :] + enc)                           # (BT, N, E)
        scores = jnp.sum(comp * w_ref, axis=-1) + b_ref                 # (BT, N)

        mx = jnp.max(scores, axis=1, keepdims=True)
        lse = jnp.log(jnp.sum(jnp.exp(scores - mx), axis=1, keepdims=True))
        logp = scores - mx - lse                          # log_softmax over tokens

        # argmax with first-index-on-tie semantics; reuse mx (argmax is invariant
        # under the monotone log_softmax shift, so compare against scores directly).
        pk = jnp.min(jnp.where(scores == mx, n_iota, N), axis=1, keepdims=True)  # (BT, 1) int32

        logp_steps.append(logp)
        pk_steps.append(pk)

        if t + 1 < T:
            # linear-cost gather: per-row one-hot over N only (no quadratic batch mask)
            onehot = (n_iota == pk).astype(tok.dtype)              # (BT, N)
            dec_in = jnp.sum(onehot[:, :, None] * tok, axis=1)     # (BT, E)

    # One consolidated, lane/sublane-contiguous store per output per grid step.
    probs_ref[...] = jnp.stack(logp_steps, axis=1)        # (BT, T, N)
    peaks_ref[...] = jnp.concatenate(pk_steps, axis=1)    # (BT, T)


def pointer_network_pallas(tok, op, params, num_operands, *, batch_block=None):
    B, N, E = tok.shape
    T = num_operands
    (W_ih, b_ih, b_hh, W_dec, b_dec, W_enc, b_enc, W_r, b_r) = params
    f32 = jnp.float32

    # Batch tile: as fat as possible (multiple of 8, <=512), but keep >=2 grid steps when
    # B >= 16 so v7x's two TensorCores both get work; otherwise take the whole batch.
    if batch_block is None:
        if B % 8 == 0:
            cap = min(512, B)
            if B >= 16:
                cap = min(cap, B // 2)
            tb = 8
            for cand in range(8, cap + 1, 8):
                if B % cand == 0:
                    tb = cand
            batch_block = tb
        else:
            batch_block = B
    tb = batch_block
    assert B % tb == 0 and (tb == B or tb % 8 == 0)

    b_lstm = b_ih + b_hh
    # PyTorch LSTMCell gate order: [input, forget, cell(g), output]; forget gate dropped (c0 = 0).
    # Fuse the three live gates into one (E, 3E) matmul.
    W_igo = jnp.concatenate(
        [W_ih[0 * E:1 * E].T, W_ih[2 * E:3 * E].T, W_ih[3 * E:4 * E].T], axis=1).astype(f32)
    b_igo = jnp.concatenate(
        [b_lstm[0 * E:1 * E], b_lstm[2 * E:3 * E], b_lstm[3 * E:4 * E]]).reshape(1, 3 * E).astype(f32)

    # b_dec folded into the hoisted encoder projection.
    b_enc_dec = (b_enc + b_dec).reshape(1, E).astype(f32)

    args = (
        tok.astype(f32), op.astype(f32),
        W_igo, b_igo,
        W_dec.T.astype(f32),
        W_enc.T.astype(f32), b_enc_dec,
        W_r.reshape(1, E).astype(f32), b_r.reshape(1, 1).astype(f32),
    )

    vmem_full = pl.BlockSpec(memory_space=pltpu.MemorySpace.VMEM)     # whole array, no tiling
    in_specs = [
        pl.BlockSpec((tb, N, E), lambda b: (b, 0, 0)),   # token_embeddings: tiled over batch
        pl.BlockSpec((tb, E), lambda b: (b, 0)),         # operator_encoded: tiled over batch
    ] + [vmem_full] * 7                                   # weights / biases: resident in VMEM

    out_specs = (
        pl.BlockSpec((tb, T, N), lambda b: (b, 0, 0)),
        pl.BlockSpec((tb, T), lambda b: (b, 0)),
    )

    return pl.pallas_call(
        pointer_network_kernel,
        out_shape=(jax.ShapeDtypeStruct((B, T, N), jnp.float32),
                   jax.ShapeDtypeStruct((B, T), jnp.int32)),
        grid=(B // tb,),
        in_specs=in_specs,
        out_specs=out_specs,
        compiler_params=pltpu.CompilerParams(
            dimension_semantics=("parallel",),           # megacore / v7x: shard batch over TCs
            vmem_limit_bytes=32 * 1024 * 1024,
        ),
    )(*args)


def pointer_network_ref(tok, op, params, num_operands):
    """Pure-JAX reference mirroring the PyTorch forward (eval mode)."""
    (W_ih, b_ih, b_hh, W_dec, b_dec, W_enc, b_enc, W_r, b_r) = params
    B, N, E = tok.shape
    enc = tok @ W_enc.T + b_enc
    dec_in = op
    probs_list, peak_list = [], []
    for _ in range(num_operands):
        gates = dec_in @ W_ih.T + b_ih + b_hh                      # h0 = c0 = 0
        i_g = jax.nn.sigmoid(gates[:, 0 * E:1 * E])
        g_g = jnp.tanh(gates[:, 2 * E:3 * E])
        o_g = jax.nn.sigmoid(gates[:, 3 * E:4 * E])
        hx = o_g * jnp.tanh(i_g * g_g)
        dq = hx @ W_dec.T + b_dec
        comp = jnp.tanh(dq[:, None, :] + enc)
        scores = (comp @ W_r.T).reshape(B, N) + b_r
        logp = jax.nn.log_softmax(scores, axis=1)
        pk = jnp.argmax(logp, axis=1)
        dec_in = tok[jnp.arange(B), pk, :]
        probs_list.append(logp)
        peak_list.append(pk)
    return jnp.stack(probs_list, axis=1), jnp.stack(peak_list, axis=1).astype(jnp.int32)


def init_params(key, embedding_dim):
    """Deterministic synthetic parameters (PyTorch-style uniform(-1/sqrt(E), 1/sqrt(E)))."""
    E = embedding_dim
    k = 1.0 / (E ** 0.5)
    ks = jax.random.split(key, 9)
    u = lambda kk, shape: jax.random.uniform(kk, shape, jnp.float32, -k, k)
    W_ih = u(ks[0], (4 * E, E))
    b_ih = u(ks[1], (4 * E,))
    b_hh = u(ks[2], (4 * E,))
    W_dec = u(ks[3], (E, E))
    b_dec = u(ks[4], (E,))
    W_enc = u(ks[5], (E, E))
    b_enc = u(ks[6], (E,))
    W_r = u(ks[7], (1, E))
    b_r = u(ks[8], (1,))
    return (W_ih, b_ih, b_hh, W_dec, b_dec, W_enc, b_enc, W_r, b_r)


if __name__ == "__main__":
    B, N, E = 2, 8, 32        # batch, n_tokens, embedding_dim
    NUM_OPERANDS = 3

    key = jax.random.PRNGKey(0)
    k_tok, k_op, k_par = jax.random.split(key, 3)
    token_embeddings = jax.random.normal(k_tok, (B, N, E), jnp.float32)
    operator_encoded = jax.random.normal(k_op, (B, E), jnp.float32)
    params = init_params(k_par, E)

    probs, peaks = pointer_network_pallas(token_embeddings, operator_encoded,
                                          params, NUM_OPERANDS)
    jax.block_until_ready((probs, peaks))

    probs_ref, peaks_ref = pointer_network_ref(token_embeddings, operator_encoded,
                                               params, NUM_OPERANDS)
    assert probs.shape == (B, NUM_OPERANDS, N)
    assert peaks.shape == (B, NUM_OPERANDS)
    assert jnp.allclose(probs, probs_ref, atol=1e-4, rtol=1e-4)
    assert jnp.array_equal(peaks, peaks_ref)

    print("KERNEL_OK")
</pallas_src>

<mosaic_0001>
module attributes {stable_mosaic.version = 11 : i64} {
  func.func @pointer_network_kernel(%arg0: i32, %arg1: memref<2x8x32xf32, #tpu.memory_space<vmem>>, %arg2: memref<2x32xf32, #tpu.memory_space<vmem>>, %arg3: memref<32x96xf32, #tpu.memory_space<vmem>>, %arg4: memref<1x96xf32, #tpu.memory_space<vmem>>, %arg5: memref<32x32xf32, #tpu.memory_space<vmem>>, %arg6: memref<32x32xf32, #tpu.memory_space<vmem>>, %arg7: memref<1x32xf32, #tpu.memory_space<vmem>>, %arg8: memref<1x32xf32, #tpu.memory_space<vmem>>, %arg9: memref<1x1xf32, #tpu.memory_space<vmem>>, %arg10: memref<2x3x8xf32, #tpu.memory_space<vmem>>, %arg11: memref<2x3xi32, #tpu.memory_space<vmem>>) attributes {dimension_semantics = [#tpu.dimension_semantics<parallel>], iteration_bounds = array<i64: 1>, scalar_prefetch = 0 : i64, scratch_operands = 0 : i64, tpu.core_type = #tpu.core_type<tc>, window_params = [{transform_indices = @transform_0, window_bounds = array<i64: 2, 8, 32>}, {transform_indices = @transform_1, window_bounds = array<i64: 2, 32>}, {pipeline_mode = #tpu.pipeline_mode<synchronous>, transform_indices = @transform_2, window_bounds = array<i64: 32, 96>}, {pipeline_mode = #tpu.pipeline_mode<synchronous>, transform_indices = @transform_3, window_bounds = array<i64: 1, 96>}, {pipeline_mode = #tpu.pipeline_mode<synchronous>, transform_indices = @transform_4, window_bounds = array<i64: 32, 32>}, {pipeline_mode = #tpu.pipeline_mode<synchronous>, transform_indices = @transform_5, window_bounds = array<i64: 32, 32>}, {pipeline_mode = #tpu.pipeline_mode<synchronous>, transform_indices = @transform_6, window_bounds = array<i64: 1, 32>}, {pipeline_mode = #tpu.pipeline_mode<synchronous>, transform_indices = @transform_7, window_bounds = array<i64: 1, 32>}, {pipeline_mode = #tpu.pipeline_mode<synchronous>, transform_indices = @transform_8, window_bounds = array<i64: 1, 1>}, {transform_indices = @transform_9, window_bounds = array<i64: 2, 3, 8>}, {transform_indices = @transform_10, window_bounds = array<i64: 2, 3>}]} {
    %c0 = arith.constant 0 : index
    %c0_0 = arith.constant 0 : index
    %c0_1 = arith.constant 0 : index
    %0 = vector.load %arg1[%c0, %c0_0, %c0_1] : memref<2x8x32xf32, #tpu.memory_space<vmem>>, vector<2x8x32xf32>
    %1 = vector.shape_cast %0 : vector<2x8x32xf32> to vector<16x32xf32>
    %c0_2 = arith.constant 0 : index
    %c0_3 = arith.constant 0 : index
    %2 = vector.load %arg3[%c0_2, %c0_3] : memref<32x96xf32, #tpu.memory_space<vmem>>, vector<32x96xf32>
    %c0_4 = arith.constant 0 : index
    %c0_5 = arith.constant 0 : index
    %3 = vector.load %arg4[%c0_4, %c0_5] : memref<1x96xf32, #tpu.memory_space<vmem>>, vector<1x96xf32>
    %c0_6 = arith.constant 0 : index
    %c0_7 = arith.constant 0 : index
    %4 = vector.load %arg5[%c0_6, %c0_7] : memref<32x32xf32, #tpu.memory_space<vmem>>, vector<32x32xf32>
    %c0_8 = arith.constant 0 : index
    %c0_9 = arith.constant 0 : index
    %5 = vector.load %arg8[%c0_8, %c0_9] : memref<1x32xf32, #tpu.memory_space<vmem>>, vector<1x32xf32>
    %6 = vector.shape_cast %5 : vector<1x32xf32> to vector<1x1x32xf32>
    %c0_10 = arith.constant 0 : index
    %c0_11 = arith.constant 0 : index
    %7 = vector.load %arg9[%c0_10, %c0_11] : memref<1x1xf32, #tpu.memory_space<vmem>>, vector<1x1xf32>
    %c0_12 = arith.constant 0 : index
    %c0_13 = arith.constant 0 : index
    %8 = vector.load %arg6[%c0_12, %c0_13] : memref<32x32xf32, #tpu.memory_space<vmem>>, vector<32x32xf32>
    %cst = arith.constant dense<0.000000e+00> : vector<16x32xf32>
    %9 = tpu.matmul %1, %8, %cst {dimension_numbers = #tpu.dot_dimension_numbers<[1], [0], [0], [1], [0, 0, 1, 1], [], []>} : vector<16x32xf32>, vector<32x32xf32>, vector<16x32xf32> -> vector<16x32xf32>
    %c0_14 = arith.constant 0 : index
    %c0_15 = arith.constant 0 : index
    %10 = vector.load %arg7[%c0_14, %c0_15] : memref<1x32xf32, #tpu.memory_space<vmem>>, vector<1x32xf32>
    %11 = vector.broadcast %10 : vector<1x32xf32> to vector<16x32xf32>
    %12 = arith.addf %9, %11 : vector<16x32xf32>
    %13 = vector.shape_cast %12 : vector<16x32xf32> to vector<2x8x32xf32>
    %14 = tpu.iota {dimensions = array<i32: 1>} : vector<2x8xi32>
    %c0_16 = arith.constant 0 : index
    %c0_17 = arith.constant 0 : index
    %15 = vector.load %arg2[%c0_16, %c0_17] : memref<2x32xf32, #tpu.memory_space<vmem>>, vector<2x32xf32>
    %cst_18 = arith.constant dense<0.000000e+00> : vector<2x96xf32>
    %16 = tpu.matmul %15, %2, %cst_18 {dimension_numbers = #tpu.dot_dimension_numbers<[1], [0], [0], [1], [0, 0, 1, 1], [], []>} : vector<2x32xf32>, vector<32x96xf32>, vector<2x96xf32> -> vector<2x96xf32>
    %17 = vector.broadcast %3 : vector<1x96xf32> to vector<2x96xf32>
    %18 = arith.addf %16, %17 : vector<2x96xf32>
    %19 = vector.extract_strided_slice %18 {offsets = [0, 0], sizes = [2, 32], strides = [1, 1]} : vector<2x96xf32> to vector<2x32xf32>
    %20 = arith.negf %19 : vector<2x32xf32>
    %21 = math.exp %20 : vector<2x32xf32>
    %cst_19 = arith.constant 1.000000e+00 : f32
    %22 = vector.broadcast %cst_19 : f32 to vector<2x32xf32>
    %23 = arith.addf %22, %21 : vector<2x32xf32>
    %24 = arith.divf %22, %23 : vector<2x32xf32>
    %25 = vector.extract_strided_slice %18 {offsets = [0, 32], sizes = [2, 32], strides = [1, 1]} : vector<2x96xf32> to vector<2x32xf32>
    %26 = math.tanh %25 : vector<2x32xf32>
    %27 = vector.extract_strided_slice %18 {offsets = [0, 64], sizes = [2, 32], strides = [1, 1]} : vector<2x96xf32> to vector<2x32xf32>
    %28 = arith.negf %27 : vector<2x32xf32>
    %29 = math.exp %28 : vector<2x32xf32>
    %cst_20 = arith.constant 1.000000e+00 : f32
    %30 = vector.broadcast %cst_20 : f32 to vector<2x32xf32>
    %31 = arith.addf %30, %29 : vector<2x32xf32>
    %32 = arith.divf %30, %31 : vector<2x32xf32>
    %33 = arith.mulf %24, %26 : vector<2x32xf32>
    %34 = math.tanh %33 : vector<2x32xf32>
    %35 = arith.mulf %32, %34 : vector<2x32xf32>
    %cst_21 = arith.constant dense<0.000000e+00> : vector<2x32xf32>
    %36 = tpu.matmul %35, %4, %cst_21 {dimension_numbers = #tpu.dot_dimension_numbers<[1], [0], [0], [1], [0, 0, 1, 1], [], []>} : vector<2x32xf32>, vector<32x32xf32>, vector<2x32xf32> -> vector<2x32xf32>
    %37 = vector.shape_cast %36 : vector<2x32xf32> to vector<2x1x32xf32>
    %38 = vector.broadcast %37 : vector<2x1x32xf32> to vector<2x8x32xf32>
    %39 = arith.addf %38, %13 : vector<2x8x32xf32>
    %40 = math.tanh %39 : vector<2x8x32xf32>
    %41 = vector.broadcast %6 : vector<1x1x32xf32> to vector<2x8x32xf32>
    %42 = arith.mulf %40, %41 : vector<2x8x32xf32>
    %cst_22 = arith.constant dense<0.000000e+00> : vector<2x8xf32>
    %43 = vector.multi_reduction <add>, %42, %cst_22 [2] : vector<2x8x32xf32> to vector<2x8xf32>
    %44 = vector.broadcast %7 : vector<1x1xf32> to vector<2x8xf32>
    %45 = arith.addf %43, %44 : vector<2x8xf32>
    %cst_23 = arith.constant dense<0xFF800000> : vector<2xf32>
    %46 = vector.multi_reduction <maximumf>, %45, %cst_23 [1] : vector<2x8xf32> to vector<2xf32>
    %47 = vector.shape_cast %46 : vector<2xf32> to vector<2x1xf32>
    %48 = vector.broadcast %47 : vector<2x1xf32> to vector<2x8xf32>
    %49 = arith.subf %45, %48 : vector<2x8xf32>
    %50 = math.exp %49 : vector<2x8xf32>
    %cst_24 = arith.constant dense<0.000000e+00> : vector<2xf32>
    %51 = vector.multi_reduction <add>, %50, %cst_24 [1] : vector<2x8xf32> to vector<2xf32>
    %52 = vector.shape_cast %51 : vector<2xf32> to vector<2x1xf32>
    %53 = math.log %52 : vector<2x1xf32>
    %54 = vector.broadcast %47 : vector<2x1xf32> to vector<2x8xf32>
    %55 = arith.subf %45, %54 : vector<2x8xf32>
    %56 = vector.broadcast %53 : vector<2x1xf32> to vector<2x8xf32>
    %57 = arith.subf %55, %56 : vector<2x8xf32>
    %58 = vector.broadcast %47 : vector<2x1xf32> to vector<2x8xf32>
    %59 = arith.cmpf oeq, %45, %58 : vector<2x8xf32>
    %c8_i32 = arith.constant 8 : i32
    %60 = vector.broadcast %c8_i32 : i32 to vector<2x8xi32>
    %61 = arith.select %59, %14, %60 : vector<2x8xi1>, vector<2x8xi32>
    %cst_25 = arith.constant dense<2147483647> : vector<2xi32>
    %62 = vector.multi_reduction <minsi>, %61, %cst_25 [1] : vector<2x8xi32> to vector<2xi32>
    %63 = vector.shape_cast %62 : vector<2xi32> to vector<2x1xi32>
    %64 = vector.broadcast %63 : vector<2x1xi32> to vector<2x8xi32>
    %65 = arith.cmpi eq, %14, %64 : vector<2x8xi32>
    %66 = arith.extui %65 : vector<2x8xi1> to vector<2x8xi32>
    %67 = arith.sitofp %66 : vector<2x8xi32> to vector<2x8xf32>
    %68 = vector.shape_cast %67 : vector<2x8xf32> to vector<2x8x1xf32>
    %69 = vector.broadcast %68 : vector<2x8x1xf32> to vector<2x8x32xf32>
    %70 = arith.mulf %69, %0 : vector<2x8x32xf32>
    %cst_26 = arith.constant dense<0.000000e+00> : vector<2x32xf32>
    %71 = vector.multi_reduction <add>, %70, %cst_26 [1] : vector<2x8x32xf32> to vector<2x32xf32>
    %cst_27 = arith.constant dense<0.000000e+00> : vector<2x96xf32>
    %72 = tpu.matmul %71, %2, %cst_27 {dimension_numbers = #tpu.dot_dimension_numbers<[1], [0], [0], [1], [0, 0, 1, 1], [], []>} : vector<2x32xf32>, vector<32x96xf32>, vector<2x96xf32> -> vector<2x96xf32>
    %73 = vector.broadcast %3 : vector<1x96xf32> to vector<2x96xf32>
    %74 = arith.addf %72, %73 : vector<2x96xf32>
    %75 = vector.extract_strided_slice %74 {offsets = [0, 0], sizes = [2, 32], strides = [1, 1]} : vector<2x96xf32> to vector<2x32xf32>
    %76 = arith.negf %75 : vector<2x32xf32>
    %77 = math.exp %76 : vector<2x32xf32>
    %cst_28 = arith.constant 1.000000e+00 : f32
    %78 = vector.broadcast %cst_28 : f32 to vector<2x32xf32>
    %79 = arith.addf %78, %77 : vector<2x32xf32>
    %80 = arith.divf %78, %79 : vector<2x32xf32>
    %81 = vector.extract_strided_slice %74 {offsets = [0, 32], sizes = [2, 32], strides = [1, 1]} : vector<2x96xf32> to vector<2x32xf32>
    %82 = math.tanh %81 : vector<2x32xf32>
    %83 = vector.extract_strided_slice %74 {offsets = [0, 64], sizes = [2, 32], strides = [1, 1]} : vector<2x96xf32> to vector<2x32xf32>
    %84 = arith.negf %83 : vector<2x32xf32>
    %85 = math.exp %84 : vector<2x32xf32>
    %cst_29 = arith.constant 1.000000e+00 : f32
    %86 = vector.broadcast %cst_29 : f32 to vector<2x32xf32>
    %87 = arith.addf %86, %85 : vector<2x32xf32>
    %88 = arith.divf %86, %87 : vector<2x32xf32>
    %89 = arith.mulf %80, %82 : vector<2x32xf32>
    %90 = math.tanh %89 : vector<2x32xf32>
    %91 = arith.mulf %88, %90 : vector<2x32xf32>
    %cst_30 = arith.constant dense<0.000000e+00> : vector<2x32xf32>
    %92 = tpu.matmul %91, %4, %cst_30 {dimension_numbers = #tpu.dot_dimension_numbers<[1], [0], [0], [1], [0, 0, 1, 1], [], []>} : vector<2x32xf32>, vector<32x32xf32>, vector<2x32xf32> -> vector<2x32xf32>
    %93 = vector.shape_cast %92 : vector<2x32xf32> to vector<2x1x32xf32>
    %94 = vector.broadcast %93 : vector<2x1x32xf32> to vector<2x8x32xf32>
    %95 = arith.addf %94, %13 : vector<2x8x32xf32>
    %96 = math.tanh %95 : vector<2x8x32xf32>
    %97 = vector.broadcast %6 : vector<1x1x32xf32> to vector<2x8x32xf32>
    %98 = arith.mulf %96, %97 : vector<2x8x32xf32>
    %cst_31 = arith.constant dense<0.000000e+00> : vector<2x8xf32>
    %99 = vector.multi_reduction <add>, %98, %cst_31 [2] : vector<2x8x32xf32> to vector<2x8xf32>
    %100 = vector.broadcast %7 : vector<1x1xf32> to vector<2x8xf32>
    %101 = arith.addf %99, %100 : vector<2x8xf32>
    %cst_32 = arith.constant dense<0xFF800000> : vector<2xf32>
    %102 = vector.multi_reduction <maximumf>, %101, %cst_32 [1] : vector<2x8xf32> to vector<2xf32>
    %103 = vector.shape_cast %102 : vector<2xf32> to vector<2x1xf32>
    %104 = vector.broadcast %103 : vector<2x1xf32> to vector<2x8xf32>
    %105 = arith.subf %101, %104 : vector<2x8xf32>
    %106 = math.exp %105 : vector<2x8xf32>
    %cst_33 = arith.constant dense<0.000000e+00> : vector<2xf32>
    %107 = vector.multi_reduction <add>, %106, %cst_33 [1] : vector<2x8xf32> to vector<2xf32>
    %108 = vector.shape_cast %107 : vector<2xf32> to vector<2x1xf32>
    %109 = math.log %108 : vector<2x1xf32>
    %110 = vector.broadcast %103 : vector<2x1xf32> to vector<2x8xf32>
    %111 = arith.subf %101, %110 : vector<2x8xf32>
    %112 = vector.broadcast %109 : vector<2x1xf32> to vector<2x8xf32>
    %113 = arith.subf %111, %112 : vector<2x8xf32>
    %114 = vector.broadcast %103 : vector<2x1xf32> to vector<2x8xf32>
    %115 = arith.cmpf oeq, %101, %114 : vector<2x8xf32>
    %c8_i32_34 = arith.constant 8 : i32
    %116 = vector.broadcast %c8_i32_34 : i32 to vector<2x8xi32>
    %117 = arith.select %115, %14, %116 : vector<2x8xi1>, vector<2x8xi32>
    %cst_35 = arith.constant dense<2147483647> : vector<2xi32>
    %118 = vector.multi_reduction <minsi>, %117, %cst_35 [1] : vector<2x8xi32> to vector<2xi32>
    %119 = vector.shape_cast %118 : vector<2xi32> to vector<2x1xi32>
    %120 = vector.broadcast %119 : vector<2x1xi32> to vector<2x8xi32>
    %121 = arith.cmpi eq, %14, %120 : vector<2x8xi32>
    %122 = arith.extui %121 : vector<2x8xi1> to vector<2x8xi32>
    %123 = arith.sitofp %122 : vector<2x8xi32> to vector<2x8xf32>
    %124 = vector.shape_cast %123 : vector<2x8xf32> to vector<2x8x1xf32>
    %125 = vector.broadcast %124 : vector<2x8x1xf32> to vector<2x8x32xf32>
    %126 = arith.mulf %125, %0 : vector<2x8x32xf32>
    %cst_36 = arith.constant dense<0.000000e+00> : vector<2x32xf32>
    %127 = vector.multi_reduction <add>, %126, %cst_36 [1] : vector<2x8x32xf32> to vector<2x32xf32>
    %cst_37 = arith.constant dense<0.000000e+00> : vector<2x96xf32>
    %128 = tpu.matmul %127, %2, %cst_37 {dimension_numbers = #tpu.dot_dimension_numbers<[1], [0], [0], [1], [0, 0, 1, 1], [], []>} : vector<2x32xf32>, vector<32x96xf32>, vector<2x96xf32> -> vector<2x96xf32>
    %129 = vector.broadcast %3 : vector<1x96xf32> to vector<2x96xf32>
    %130 = arith.addf %128, %129 : vector<2x96xf32>
    %131 = vector.extract_strided_slice %130 {offsets = [0, 0], sizes = [2, 32], strides = [1, 1]} : vector<2x96xf32> to vector<2x32xf32>
    %132 = arith.negf %131 : vector<2x32xf32>
    %133 = math.exp %132 : vector<2x32xf32>
    %cst_38 = arith.constant 1.000000e+00 : f32
    %134 = vector.broadcast %cst_38 : f32 to vector<2x32xf32>
    %135 = arith.addf %134, %133 : vector<2x32xf32>
    %136 = arith.divf %134, %135 : vector<2x32xf32>
    %137 = vector.extract_strided_slice %130 {offsets = [0, 32], sizes = [2, 32], strides = [1, 1]} : vector<2x96xf32> to vector<2x32xf32>
    %138 = math.tanh %137 : vector<2x32xf32>
    %139 = vector.extract_strided_slice %130 {offsets = [0, 64], sizes = [2, 32], strides = [1, 1]} : vector<2x96xf32> to vector<2x32xf32>
    %140 = arith.negf %139 : vector<2x32xf32>
    %141 = math.exp %140 : vector<2x32xf32>
    %cst_39 = arith.constant 1.000000e+00 : f32
    %142 = vector.broadcast %cst_39 : f32 to vector<2x32xf32>
    %143 = arith.addf %142, %141 : vector<2x32xf32>
    %144 = arith.divf %142, %143 : vector<2x32xf32>
    %145 = arith.mulf %136, %138 : vector<2x32xf32>
    %146 = math.tanh %145 : vector<2x32xf32>
    %147 = arith.mulf %144, %146 : vector<2x32xf32>
    %cst_40 = arith.constant dense<0.000000e+00> : vector<2x32xf32>
    %148 = tpu.matmul %147, %4, %cst_40 {dimension_numbers = #tpu.dot_dimension_numbers<[1], [0], [0], [1], [0, 0, 1, 1], [], []>} : vector<2x32xf32>, vector<32x32xf32>, vector<2x32xf32> -> vector<2x32xf32>
    %149 = vector.shape_cast %148 : vector<2x32xf32> to vector<2x1x32xf32>
    %150 = vector.broadcast %149 : vector<2x1x32xf32> to vector<2x8x32xf32>
    %151 = arith.addf %150, %13 : vector<2x8x32xf32>
    %152 = math.tanh %151 : vector<2x8x32xf32>
    %153 = vector.broadcast %6 : vector<1x1x32xf32> to vector<2x8x32xf32>
    %154 = arith.mulf %152, %153 : vector<2x8x32xf32>
    %cst_41 = arith.constant dense<0.000000e+00> : vector<2x8xf32>
    %155 = vector.multi_reduction <add>, %154, %cst_41 [2] : vector<2x8x32xf32> to vector<2x8xf32>
    %156 = vector.broadcast %7 : vector<1x1xf32> to vector<2x8xf32>
    %157 = arith.addf %155, %156 : vector<2x8xf32>
    %cst_42 = arith.constant dense<0xFF800000> : vector<2xf32>
    %158 = vector.multi_reduction <maximumf>, %157, %cst_42 [1] : vector<2x8xf32> to vector<2xf32>
    %159 = vector.shape_cast %158 : vector<2xf32> to vector<2x1xf32>
    %160 = vector.broadcast %159 : vector<2x1xf32> to vector<2x8xf32>
    %161 = arith.subf %157, %160 : vector<2x8xf32>
    %162 = math.exp %161 : vector<2x8xf32>
    %cst_43 = arith.constant dense<0.000000e+00> : vector<2xf32>
    %163 = vector.multi_reduction <add>, %162, %cst_43 [1] : vector<2x8xf32> to vector<2xf32>
    %164 = vector.shape_cast %163 : vector<2xf32> to vector<2x1xf32>
    %165 = math.log %164 : vector<2x1xf32>
    %166 = vector.broadcast %159 : vector<2x1xf32> to vector<2x8xf32>
    %167 = arith.subf %157, %166 : vector<2x8xf32>
    %168 = vector.broadcast %165 : vector<2x1xf32> to vector<2x8xf32>
    %169 = arith.subf %167, %168 : vector<2x8xf32>
    %170 = vector.broadcast %159 : vector<2x1xf32> to vector<2x8xf32>
    %171 = arith.cmpf oeq, %157, %170 : vector<2x8xf32>
    %c8_i32_44 = arith.constant 8 : i32
    %172 = vector.broadcast %c8_i32_44 : i32 to vector<2x8xi32>
    %173 = arith.select %171, %14, %172 : vector<2x8xi1>, vector<2x8xi32>
    %cst_45 = arith.constant dense<2147483647> : vector<2xi32>
    %174 = vector.multi_reduction <minsi>, %173, %cst_45 [1] : vector<2x8xi32> to vector<2xi32>
    %175 = vector.shape_cast %174 : vector<2xi32> to vector<2x1xi32>
    %176 = vector.shape_cast %57 : vector<2x8xf32> to vector<2x1x8xf32>
    %177 = vector.shape_cast %113 : vector<2x8xf32> to vector<2x1x8xf32>
    %178 = vector.shape_cast %169 : vector<2x8xf32> to vector<2x1x8xf32>
    %179 = tpu.concatenate %176, %177, %178 in 1 : vector<2x1x8xf32>, vector<2x1x8xf32>, vector<2x1x8xf32> -> vector<2x3x8xf32>
    %c0_46 = arith.constant 0 : index
    %c0_47 = arith.constant 0 : index
    %c0_48 = arith.constant 0 : index
    %180 = vector.load %arg10[%c0_46, %c0_47, %c0_48] : memref<2x3x8xf32, #tpu.memory_space<vmem>>, vector<2x3x8xf32>
    tpu.vector_store %arg10[%c0_46, %c0_47, %c0_48], %179 {strides = array<i32>} : memref<2x3x8xf32, #tpu.memory_space<vmem>>, vector<2x3x8xf32>,
    %181 = tpu.concatenate %63, %119, %175 in 1 : vector<2x1xi32>, vector<2x1xi32>, vector<2x1xi32> -> vector<2x3xi32>
    %c0_49 = arith.constant 0 : index
    %c0_50 = arith.constant 0 : index
    %182 = vector.load %arg11[%c0_49, %c0_50] : memref<2x3xi32, #tpu.memory_space<vmem>>, vector<2x3xi32>
    tpu.vector_store %arg11[%c0_49, %c0_50], %181 {strides = array<i32>} : memref<2x3xi32, #tpu.memory_space<vmem>>, vector<2x3xi32>,
    return
  }
  func.func @transform_0(%arg0: i32) -> (i32, i32, i32) {
    %c0_i32 = arith.constant 0 : i32
    %c0_i32_0 = arith.constant 0 : i32
    %c0_i32_1 = arith.constant 0 : i32
    return %arg0, %c0_i32, %c0_i32_0 : i32, i32, i32
  }
  func.func @transform_1(%arg0: i32) -> (i32, i32) {
    %c0_i32 = arith.constant 0 : i32
    %c0_i32_0 = arith.constant 0 : i32
    return %arg0, %c0_i32 : i32, i32
  }
  func.func @transform_2(%arg0: i32) -> (i32, i32) {
    %c0_i32 = arith.constant 0 : i32
    %c0_i32_0 = arith.constant 0 : i32
    %c0_i32_1 = arith.constant 0 : i32
    return %c0_i32, %c0_i32_0 : i32, i32
  }
  func.func @transform_3(%arg0: i32) -> (i32, i32) {
    %c0_i32 = arith.constant 0 : i32
    %c0_i32_0 = arith.constant 0 : i32
    %c0_i32_1 = arith.constant 0 : i32
    return %c0_i32, %c0_i32_0 : i32, i32
  }
  func.func @transform_4(%arg0: i32) -> (i32, i32) {
    %c0_i32 = arith.constant 0 : i32
    %c0_i32_0 = arith.constant 0 : i32
    %c0_i32_1 = arith.constant 0 : i32
    return %c0_i32, %c0_i32_0 : i32, i32
  }
  func.func @transform_5(%arg0: i32) -> (i32, i32) {
    %c0_i32 = arith.constant 0 : i32
    %c0_i32_0 = arith.constant 0 : i32
    %c0_i32_1 = arith.constant 0 : i32
    return %c0_i32, %c0_i32_0 : i32, i32
  }
  func.func @transform_6(%arg0: i32) -> (i32, i32) {
    %c0_i32 = arith.constant 0 : i32
    %c0_i32_0 = arith.constant 0 : i32
    %c0_i32_1 = arith.constant 0 : i32
    return %c0_i32, %c0_i32_0 : i32, i32
  }
  func.func @transform_7(%arg0: i32) -> (i32, i32) {
    %c0_i32 = arith.constant 0 : i32
    %c0_i32_0 = arith.constant 0 : i32
    %c0_i32_1 = arith.constant 0 : i32
    return %c0_i32, %c0_i32_0 : i32, i32
  }
  func.func @transform_8(%arg0: i32) -> (i32, i32) {
    %c0_i32 = arith.constant 0 : i32
    %c0_i32_0 = arith.constant 0 : i32
    %c0_i32_1 = arith.constant 0 : i32
    return %c0_i32, %c0_i32_0 : i32, i32
  }
  func.func @transform_9(%arg0: i32) -> (i32, i32, i32) {
    %c0_i32 = arith.constant 0 : i32
    %c0_i32_0 = arith.constant 0 : i32
    %c0_i32_1 = arith.constant 0 : i32
    return %arg0, %c0_i32, %c0_i32_0 : i32, i32, i32
  }
  func.func @transform_10(%arg0: i32) -> (i32, i32) {
    %c0_i32 = arith.constant 0 : i32
    %c0_i32_0 = arith.constant 0 : i32
    return %arg0, %c0_i32 : i32, i32
  }
}

</mosaic_0001>

<llo_original>
// kernel: tpu_custom_call.1
$region0: #{tpu_custom_call.1}
  #allocation0 [shape = 'u32[]', space=smem, size = 0x4, offset = 0x4, fixed_abs, tag = 'smem constant byte address 0x4 - core index']
  #allocation1 [shape = 'u32[144,128]{1,0:T(1,128)}', space=vmem, size = 0x12000, scoped, tag = 'internal scratch']
  #allocation2 [shape = 'f32[1,1]{1,0:T(1,128)S(1)}', space=vmem, size = 0x200, scoped, tag = 'scoped memory for tpu_custom_call.1']
  %s0 = inlined_call_operand.hbm [shape: f32[2,8,32], index: 0, kind: input, shape index: {}]
  %s1 = inlined_call_operand.vmem [shape: f32[2,32], index: 1, kind: input, shape index: {}]
  %s2 = inlined_call_operand.hbm [shape: f32[32,96], index: 2, kind: input, shape index: {}]
  %s3 = inlined_call_operand.vmem [shape: f32[1,96], index: 3, kind: input, shape index: {}]
  %s4 = inlined_call_operand.hbm [shape: f32[32,32], index: 4, kind: input, shape index: {}]
  %s5 = inlined_call_operand.hbm [shape: f32[32,32], index: 5, kind: input, shape index: {}]
  %s6 = inlined_call_operand.vmem [shape: f32[1,32], index: 6, kind: input, shape index: {}]
  %s7 = inlined_call_operand.vmem [shape: f32[1,32], index: 7, kind: input, shape index: {}]
  %s8 = inlined_call_operand.<no memory space> [shape: f32[1,1], index: 8, kind: input, shape index: {}]
  %s9 = inlined_call_operand.vmem [shape: f32[2,3,8], index: 9, kind: output, shape index: {0}]
  %s10 = inlined_call_operand.hbm [shape: s32[2,3], index: 10, kind: output, shape index: {1}]
  %11 = xla_tuple %s9, %s10
  %s12 = sld [smem:[#allocation0]]
  $region70: #{tpu_custom_call.1} parent=0
    _
  %s14 = ssub.s32 1, %s12
  %s15 = scalar_select 0, %s14, %s12
  %v16 = vstv %s8
  %17 = vst [vmem:[#allocation2] sm:$0x1] %v16
  $region1: #{tpu_custom_call.1} parent=0
    #allocation3 [shape = 'u8[8192]{0}', space=vmem, size = 0x2000, scoped, tag = 'input window, operand 0, single buffered']
    #allocation4 [shape = 's32[1]{0}', space=sflag, size = 0x4, scoped, tag = 'scoped memory for tpu_custom_call.1']
    #allocation5 [shape = 's32[1]{0}', space=sflag, size = 0x4, scoped, tag = 'scoped memory for tpu_custom_call.1']
    #allocation6 [shape = 'u8[16384]{0}', space=vmem, size = 0x4000, scoped, tag = 'input window, operand 2, single buffered']
    #allocation7 [shape = 's32[1]{0}', space=sflag, size = 0x4, scoped, tag = 'scoped memory for tpu_custom_call.1']
    #allocation8 [shape = 'u8[16384]{0}', space=vmem, size = 0x4000, scoped, tag = 'input window, operand 4, single buffered']
    #allocation9 [shape = 'u8[16384]{0}', space=vmem, size = 0x4000, scoped, tag = 'input window, operand 5, single buffered']
    #allocation10 [shape = 's32[1]{0}', space=sflag, size = 0x4, scoped, tag = 'scoped memory for tpu_custom_call.1']
    #allocation11 [shape = 'u8[1024]{0}', space=vmem, size = 0x400, scoped, tag = 'output window, operand 1, single buffered']
    %18 = vsyncpa [#allocation4], 0
    %19 = vsyncpa [#allocation7], 0
    %20 = vsyncpa [#allocation10], 0
    %21 = vsyncpa [#allocation5], 0
    // Predicated region
    $region2: #{tpu_custom_call.1} parent=1 // pred_check
      _
    $region3: #{tpu_custom_call.1} parent=1 // pred_check_branch
      %23 = sbr.rel (0) target = $region5
    $region4: #{tpu_custom_call.1} parent=1 // pred_region
      %s25 = ssub.s32 256, 256
      %26 = vsyncadd [#allocation4], %s25
      %s27 = sshll.u32 [#allocation3], 4
      %s28 = int_to_ptr.vmem [resolvable:$true] %s27
      %33 = dma.hbm_to_vmem [thread:$0]  %s0, 256, %s28, [#allocation4], 128, 128, 8
    $region5: #{tpu_custom_call.1} parent=1 // pred_fallthru
      _
    // Predicated region
    $region6: #{tpu_custom_call.1} parent=1 // pred_check
      _
    $region7: #{tpu_custom_call.1} parent=1 // pred_check_branch
      %35 = sbr.rel (0) target = $region9
    $region8: #{tpu_custom_call.1} parent=1 // pred_region
      _
    $region9: #{tpu_custom_call.1} parent=1 // pred_fallthru
      _
    // Predicated region
    $region10: #{tpu_custom_call.1} parent=1 // pred_check
      _
    $region11: #{tpu_custom_call.1} parent=1 // pred_check_branch
      %37 = sbr.rel (0) target = $region13
    $region12: #{tpu_custom_call.1} parent=1 // pred_region
      %s39 = ssub.s32 512, 512
      %40 = vsyncadd [#allocation7], %s39
      %s41 = sshll.u32 [#allocation6], 4
      %s42 = int_to_ptr.vmem [resolvable:$true] %s41
      %47 = dma.hbm_to_vmem [thread:$0]  %s2, 512, %s42, [#allocation7], 128, 128, 8
    $region13: #{tpu_custom_call.1} parent=1 // pred_fallthru
      _
    // Predicated region
    $region14: #{tpu_custom_call.1} parent=1 // pred_check
      _
    $region15: #{tpu_custom_call.1} parent=1 // pred_check_branch
      %49 = sbr.rel (0) target = $region17
    $region16: #{tpu_custom_call.1} parent=1 // pred_region
      _
    $region17: #{tpu_custom_call.1} parent=1 // pred_fallthru
      _
    // Predicated region
    $region18: #{tpu_custom_call.1} parent=1 // pred_check
      _
    $region19: #{tpu_custom_call.1} parent=1 // pred_check_branch
      %51 = sbr.rel (0) target = $region21
    $region20: #{tpu_custom_call.1} parent=1 // pred_region
      %s53 = ssub.s32 512, 512
      %54 = vsyncadd [#allocation7], %s53
      %s55 = sshll.u32 [#allocation8], 4
      %s56 = int_to_ptr.vmem [resolvable:$true] %s55
      %61 = dma.hbm_to_vmem [thread:$0]  %s4, 512, %s56, [#allocation7], 128, 128, 8
    $region21: #{tpu_custom_call.1} parent=1 // pred_fallthru
      _
    // Predicated region
    $region22: #{tpu_custom_call.1} parent=1 // pred_check
      _
    $region23: #{tpu_custom_call.1} parent=1 // pred_check_branch
      %63 = sbr.rel (0) target = $region25
    $region24: #{tpu_custom_call.1} parent=1 // pred_region
      %s65 = ssub.s32 512, 512
      %66 = vsyncadd [#allocation10], %s65
      %s67 = sshll.u32 [#allocation9], 4
      %s68 = int_to_ptr.vmem [resolvable:$true] %s67
      %73 = dma.hbm_to_vmem [thread:$0]  %s5, 512, %s68, [#allocation10], 128, 128, 8
    $region25: #{tpu_custom_call.1} parent=1 // pred_fallthru
      _
    // Predicated region
    $region26: #{tpu_custom_call.1} parent=1 // pred_check
      _
    $region27: #{tpu_custom_call.1} parent=1 // pred_check_branch
      %75 = sbr.rel (0) target = $region29
    $region28: #{tpu_custom_call.1} parent=1 // pred_region
      _
    $region29: #{tpu_custom_call.1} parent=1 // pred_fallthru
      _
    // Predicated region
    $region30: #{tpu_custom_call.1} parent=1 // pred_check
      _
    $region31: #{tpu_custom_call.1} parent=1 // pred_check_branch
      %77 = sbr.rel (0) target = $region33
    $region32: #{tpu_custom_call.1} parent=1 // pred_region
      _
    $region33: #{tpu_custom_call.1} parent=1 // pred_fallthru
      _
    // Predicated region
    $region34: #{tpu_custom_call.1} parent=1 // pred_check
      _
    $region35: #{tpu_custom_call.1} parent=1 // pred_check_branch
      %79 = sbr.rel (0) target = $region37
    $region36: #{tpu_custom_call.1} parent=1 // pred_region
      _
    $region37: #{tpu_custom_call.1} parent=1 // pred_fallthru
      _
    // Predicated region
    $region38: #{tpu_custom_call.1} parent=1 // pred_check
      _
    $region39: #{tpu_custom_call.1} parent=1 // pred_check_branch
      %81 = sbr.rel (0) target = $region41
    $region40: #{tpu_custom_call.1} parent=1 // pred_region
      %82 = dma.done [#allocation4], 256
    $region41: #{tpu_custom_call.1} parent=1 // pred_fallthru
      _
    // Predicated region
    $region42: #{tpu_custom_call.1} parent=1 // pred_check
      _
    $region43: #{tpu_custom_call.1} parent=1 // pred_check_branch
      %84 = sbr.rel (0) target = $region45
    $region44: #{tpu_custom_call.1} parent=1 // pred_region
      %85 = dma.done [#allocation7], 512
    $region45: #{tpu_custom_call.1} parent=1 // pred_fallthru
      _
    // Predicated region
    $region46: #{tpu_custom_call.1} parent=1 // pred_check
      _
    $region47: #{tpu_custom_call.1} parent=1 // pred_check_branch
      %87 = sbr.rel (0) target = $region49
    $region48: #{tpu_custom_call.1} parent=1 // pred_region
      %88 = dma.done [#allocation7], 512
    $region49: #{tpu_custom_call.1} parent=1 // pred_fallthru
      _
    // Predicated region
    $region50: #{tpu_custom_call.1} parent=1 // pred_check
      _
    $region51: #{tpu_custom_call.1} parent=1 // pred_check_branch
      %90 = sbr.rel (0) target = $region53
    $region52: #{tpu_custom_call.1} parent=1 // pred_region
      %91 = dma.done [#allocation10], 512
    $region53: #{tpu_custom_call.1} parent=1 // pred_fallthru
      _
    %v92 = vld [vmem:[#allocation3] sm:$0xff]
    %v93 = vld [vmem:[#allocation3 + $0x8] sm:$0xff]
    %v94 = vld [vmem:[#allocation6] sm:$0xff]
    %v95 = vld [vmem:[#allocation6 + $0x8] sm:$0xff]
    %v96 = vld [vmem:[#allocation6 + $0x10] sm:$0xff]
    %v97 = vld [vmem:[#allocation6 + $0x18] sm:$0xff]
    %v98 = vld [vmem:[%s3] sm:$0x1]
    %v99 = vld [vmem:[#allocation8] sm:$0xff]
    %v100 = vld [vmem:[#allocation8 + $0x8] sm:$0xff]
    %v101 = vld [vmem:[#allocation8 + $0x10] sm:$0xff]
    %v102 = vld [vmem:[#allocation8 + $0x18] sm:$0xff]
    %v103 = vld [vmem:[%s7] sm:$0x1]
    %v104 = vld [vmem:[#allocation2] sm:$0x1]
    %v105 = vld [vmem:[#allocation9] sm:$0xff]
    %v106 = vld [vmem:[#allocation9 + $0x8] sm:$0xff]
    %v107 = vld [vmem:[#allocation9 + $0x10] sm:$0xff]
    %v108 = vld [vmem:[#allocation9 + $0x18] sm:$0xff]
    %v109 = vld [vmem:[%s6] sm:$0x1]
    %v111 = vlaneseq
    %v112 = vshrl.u32 %v111, 7
    %v113 = vsub.s32 0, %v112
    %v114 = vrot.slane %v109, %v113
    %vm116 = vcmask 261120
    %v118 = vsel %vm116, %v92, 0
    %v121 = vsel %vm116, %v93, 0
    %123 = vmatprep.subr.mxu0 0.0
    %124 = vmatpush1.msra.mxu0 %v105
    %125 = vmatprep.subr.mxu0 0.0
    %126 = vmatpush1.msra.mxu0 %v106
    %127 = vmatprep.subr.mxu0 0.0
    %128 = vmatpush1.msra.mxu0 %v107
    %129 = vmatprep.subr.mxu0 0.0
    %130 = vmatpush1.msra.mxu0 %v108
    %131 = vmatprep.subr.mxu0 0.0
    %132 = vmatpush1.msra.mxu0 0.0
    %133 = vmatprep.subr.mxu0 0.0
    %134 = vmatpush1.msra.mxu0 0.0
    %135 = vmatprep.subr.mxu0 0.0
    %136 = vmatpush1.msra.mxu0 0.0
    %137 = vmatprep.subr.mxu0 0.0
    %138 = vmatpush1.msra.mxu0 0.0
    %139 = vmatprep.subr.mxu0 0.0
    %140 = vmatpush1.msra.mxu0 0.0
    %141 = vmatprep.subr.mxu0 0.0
    %142 = vmatpush1.msra.mxu0 0.0
    %143 = vmatprep.subr.mxu0 0.0
    %144 = vmatpush1.msra.mxu0 0.0
    %145 = vmatprep.subr.mxu0 0.0
    %146 = vmatpush1.msra.mxu0 0.0
    %147 = vmatprep.subr.mxu0 0.0
    %148 = vmatpush1.msra.mxu0 0.0
    %149 = vmatprep.subr.mxu0 0.0
    %150 = vmatpush1.msra.mxu0 0.0
    %151 = vmatprep.subr.mxu0 0.0
    %152 = vmatpush1.msra.mxu0 0.0
    %153 = vmatprep.subr.mxu0 0.0
    %154 = vmatpush1.msra.mxu0 0.0
    %155 = vmatprep.subr.mxu0 0.0
    %156 = vmatpush1.msra.mxu0 0.0
    %157 = vmatprep.subr.mxu0 0.0
    %158 = vmatpush1.msra.mxu0 0.0
    %159 = vmatprep.subr.mxu0 0.0
    %160 = vmatpush1.msra.mxu0 0.0
    %161 = vmatprep.subr.mxu0 0.0
    %162 = vmatpush1.msra.mxu0 0.0
    %163 = vmatprep.subr.mxu0 0.0
    %164 = vmatpush1.msra.mxu0 0.0
    %165 = vmatprep.subr.mxu0 0.0
    %166 = vmatpush1.msra.mxu0 0.0
    %167 = vmatprep.subr.mxu0 0.0
    %168 = vmatpush1.msra.mxu0 0.0
    %169 = vmatprep.subr.mxu0 0.0
    %170 = vmatpush1.msra.mxu0 0.0
    %171 = vmatprep.subr.mxu0 0.0
    %172 = vmatpush1.msra.mxu0 0.0
    %173 = vmatprep.subr.mxu0 0.0
    %174 = vmatpush1.msra.mxu0 0.0
    %175 = vmatprep.subr.mxu0 0.0
    %176 = vmatpush1.msra.mxu0 0.0
    %177 = vmatprep.subr.mxu0 0.0
    %178 = vmatpush1.msra.mxu0 0.0
    %179 = vmatprep.subr.mxu0 0.0
    %180 = vmatpush1.msra.mxu0 0.0
    %181 = vmatprep.subr.mxu0 0.0
    %182 = vmatpush1.msra.mxu0 0.0
    %183 = vmatprep.subr.mxu0 0.0
    %184 = vmatpush1.msra.mxu0 0.0
    %185 = vmatprep.subr.mxu0 0.0
    %186 = vmatpush1.msra.mxu0 0.0
    %187 = vmatprep.mubr.f32.mxu0 0.0
    %188 = vmatmul.mubr.f32.gmra.mrb[0].mxu0 %v118
    %v189 = vpop.f32.mrb[0].mxu0
    %v190 = vadd.f32 %v114, %v189
    %v191 = vpop.f32.mrb[0].mxu0
    %192 = vmatprep.mubr.f32.mxu0 0.0
    %193 = vmatmul.mubr.f32.gmra.mrb[0].mxu0 %v121
    %v194 = vpop.f32.mrb[0].mxu0
    %v195 = vadd.f32 %v114, %v194
    %v196 = vpop.f32.mrb[0].mxu0
    %197 = vdwg.mxu0
    %v198 = vlaneseq
    %v199 = vand.u32 %v198, 127
    %v200 = vld [vmem:[%s1] sm:$0x3]
    %v202 = vlaneseq
    %v203 = vshrl.u32 %v202, 7
    %v204 = vsub.s32 0, %v203
    %v205 = vrot.slane %v98, %v204
    %v208 = vsel %vm116, %v200, 0
    %210 = vmatprep.subr.mxu0 0.0
    %211 = vmatpush1.msra.mxu0 %v94
    %212 = vmatprep.subr.mxu0 0.0
    %213 = vmatpush1.msra.mxu0 %v95
    %214 = vmatprep.subr.mxu0 0.0
    %215 = vmatpush1.msra.mxu0 %v96
    %216 = vmatprep.subr.mxu0 0.0
    %217 = vmatpush1.msra.mxu0 %v97
    %218 = vmatprep.subr.mxu0 0.0
    %219 = vmatpush1.msra.mxu0 0.0
    %220 = vmatprep.subr.mxu0 0.0
    %221 = vmatpush1.msra.mxu0 0.0
    %222 = vmatprep.subr.mxu0 0.0
    %223 = vmatpush1.msra.mxu0 0.0
    %224 = vmatprep.subr.mxu0 0.0
    %225 = vmatpush1.msra.mxu0 0.0
    %226 = vmatprep.subr.mxu0 0.0
    %227 = vmatpush1.msra.mxu0 0.0
    %228 = vmatprep.subr.mxu0 0.0
    %229 = vmatpush1.msra.mxu0 0.0
    %230 = vmatprep.subr.mxu0 0.0
    %231 = vmatpush1.msra.mxu0 0.0
    %232 = vmatprep.subr.mxu0 0.0
    %233 = vmatpush1.msra.mxu0 0.0
    %234 = vmatprep.subr.mxu0 0.0
    %235 = vmatpush1.msra.mxu0 0.0
    %236 = vmatprep.subr.mxu0 0.0
    %237 = vmatpush1.msra.mxu0 0.0
    %238 = vmatprep.subr.mxu0 0.0
    %239 = vmatpush1.msra.mxu0 0.0
    %240 = vmatprep.subr.mxu0 0.0
    %241 = vmatpush1.msra.mxu0 0.0
    %242 = vmatprep.subr.mxu0 0.0
    %243 = vmatpush1.msra.mxu0 0.0
    %244 = vmatprep.subr.mxu0 0.0
    %245 = vmatpush1.msra.mxu0 0.0
    %246 = vmatprep.subr.mxu0 0.0
    %247 = vmatpush1.msra.mxu0 0.0
    %248 = vmatprep.subr.mxu0 0.0
    %249 = vmatpush1.msra.mxu0 0.0
    %250 = vmatprep.subr.mxu0 0.0
    %251 = vmatpush1.msra.mxu0 0.0
    %252 = vmatprep.subr.mxu0 0.0
    %253 = vmatpush1.msra.mxu0 0.0
    %254 = vmatprep.subr.mxu0 0.0
    %255 = vmatpush1.msra.mxu0 0.0
    %256 = vmatprep.subr.mxu0 0.0
    %257 = vmatpush1.msra.mxu0 0.0
    %258 = vmatprep.subr.mxu0 0.0
    %259 = vmatpush1.msra.mxu0 0.0
    %260 = vmatprep.subr.mxu0 0.0
    %261 = vmatpush1.msra.mxu0 0.0
    %262 = vmatprep.subr.mxu0 0.0
    %263 = vmatpush1.msra.mxu0 0.0
    %264 = vmatprep.subr.mxu0 0.0
    %265 = vmatpush1.msra.mxu0 0.0
    %266 = vmatprep.subr.mxu0 0.0
    %267 = vmatpush1.msra.mxu0 0.0
    %268 = vmatprep.subr.mxu0 0.0
    %269 = vmatpush1.msra.mxu0 0.0
    %270 = vmatprep.subr.mxu0 0.0
    %271 = vmatpush1.msra.mxu0 0.0
    %272 = vmatprep.subr.mxu0 0.0
    %273 = vmatpush1.msra.mxu0 0.0
    %274 = vmatprep.mubr.f32.mxu0 0.0
    %275 = vmatmul.mubr.f32.gmra.mrb[0].mxu0 %v208
    %v276 = vpop.f32.mrb[0].mxu0
    %v277 = vadd.f32 %v205, %v276
    %v278 = vpop.f32.mrb[0].mxu0
    %279 = vdwg.mxu0
    %v280 = vxor.u32 %v277, 2147483648
    %v281 = vmul.f32 %v280, 1.442695
    %v282 = vpow.pop %v281
    %v283 = vadd.f32 %v282, 1.0
    %v284 = vrcp.pop %v283
    %v285 = vmul.f32 1.0, %v284
    %v286 = vtanh.pop %v277
    %288 = vrot.lane.b32.xlu0 %v286, 96
    %v289 = vpop.permute.xlu0 %288
    %v291 = vmul.f32 %v285, %v289
    %v292 = vtanh.pop %v291
    %294 = vrot.lane.b32.xlu0 %v292, 64
    %v295 = vpop.permute.xlu0 %294
    %v297 = vmul.f32 %v285, %v295
    %299 = vrot.lane.b32.xlu0 %v297, 64
    %v300 = vpop.permute.xlu0 %299
    %v301 = vsel %vm116, %v300, 0
    %303 = vmatprep.subr.mxu0 0.0
    %304 = vmatpush1.msra.mxu0 %v99
    %305 = vmatprep.subr.mxu0 0.0
    %306 = vmatpush1.msra.mxu0 %v100
    %307 = vmatprep.subr.mxu0 0.0
    %308 = vmatpush1.msra.mxu0 %v101
    %309 = vmatprep.subr.mxu0 0.0
    %310 = vmatpush1.msra.mxu0 %v102
    %311 = vmatprep.subr.mxu0 0.0
    %312 = vmatpush1.msra.mxu0 0.0
    %313 = vmatprep.subr.mxu0 0.0
    %314 = vmatpush1.msra.mxu0 0.0
    %315 = vmatprep.subr.mxu0 0.0
    %316 = vmatpush1.msra.mxu0 0.0
    %317 = vmatprep.subr.mxu0 0.0
    %318 = vmatpush1.msra.mxu0 0.0
    %319 = vmatprep.subr.mxu0 0.0
    %320 = vmatpush1.msra.mxu0 0.0
    %321 = vmatprep.subr.mxu0 0.0
    %322 = vmatpush1.msra.mxu0 0.0
    %323 = vmatprep.subr.mxu0 0.0
    %324 = vmatpush1.msra.mxu0 0.0
    %325 = vmatprep.subr.mxu0 0.0
    %326 = vmatpush1.msra.mxu0 0.0
    %327 = vmatprep.subr.mxu0 0.0
    %328 = vmatpush1.msra.mxu0 0.0
    %329 = vmatprep.subr.mxu0 0.0
    %330 = vmatpush1.msra.mxu0 0.0
    %331 = vmatprep.subr.mxu0 0.0
    %332 = vmatpush1.msra.mxu0 0.0
    %333 = vmatprep.subr.mxu0 0.0
    %334 = vmatpush1.msra.mxu0 0.0
    %335 = vmatprep.subr.mxu0 0.0
    %336 = vmatpush1.msra.mxu0 0.0
    %337 = vmatprep.subr.mxu0 0.0
    %338 = vmatpush1.msra.mxu0 0.0
    %339 = vmatprep.subr.mxu0 0.0
    %340 = vmatpush1.msra.mxu0 0.0
    %341 = vmatprep.subr.mxu0 0.0
    %342 = vmatpush1.msra.mxu0 0.0
    %343 = vmatprep.subr.mxu0 0.0
    %344 = vmatpush1.msra.mxu0 0.0
    %345 = vmatprep.subr.mxu0 0.0
    %346 = vmatpush1.msra.mxu0 0.0
    %347 = vmatprep.subr.mxu0 0.0
    %348 = vmatpush1.msra.mxu0 0.0
    %349 = vmatprep.subr.mxu0 0.0
    %350 = vmatpush1.msra.mxu0 0.0
    %351 = vmatprep.subr.mxu0 0.0
    %352 = vmatpush1.msra.mxu0 0.0
    %353 = vmatprep.subr.mxu0 0.0
    %354 = vmatpush1.msra.mxu0 0.0
    %355 = vmatprep.subr.mxu0 0.0
    %356 = vmatpush1.msra.mxu0 0.0
    %357 = vmatprep.subr.mxu0 0.0
    %358 = vmatpush1.msra.mxu0 0.0
    %359 = vmatprep.subr.mxu0 0.0
    %360 = vmatpush1.msra.mxu0 0.0
    %361 = vmatprep.subr.mxu0 0.0
    %362 = vmatpush1.msra.mxu0 0.0
    %363 = vmatprep.subr.mxu0 0.0
    %364 = vmatpush1.msra.mxu0 0.0
    %365 = vmatprep.subr.mxu0 0.0
    %366 = vmatpush1.msra.mxu0 0.0
    %367 = vmatprep.mubr.f32.mxu0 0.0
    %368 = vmatmul.mubr.f32.gmra.mrb[0].mxu0 %v301
    %v369 = vpop.f32.mrb[0].mxu0
    %v370 = vadd.f32 0.0, %v369
    %v371 = vpop.f32.mrb[0].mxu0
    %372 = vdwg.mxu0
    %v375 = vunpack.c.l.s4 1966171168
    %v376 = vunpack.c.0.s8 %v375
    %v377 = vlaneseq
    %v378 = vshrl.u32 %v377, 7
    %v379 = vsub.s32 %v376, %v378
    %v380 = vrot.slane %v370, %v379
    %v381 = vcombine.high %v380, %v380
    %v383 = vunpack.c.l.s4 1966171168
    %v384 = vunpack.c.0.s8 %v383
    %v385 = vlaneseq
    %v386 = vshrl.u32 %v385, 7
    %v387 = vsub.s32 %v384, %v386
    %v388 = vrot.slane %v380, %v387
    %v390 = vunpack.c.l.s4 1966171168
    %v391 = vunpack.c.0.s8 %v390
    %v392 = vlaneseq
    %v393 = vshrl.u32 %v392, 7
    %v394 = vsub.s32 %v391, %v393
    %v395 = vrot.slane %v381, %v394
    %v396 = vlaneseq
    %v397 = vshrl.u32 %v396, 7
    %v398 = vsub.s32 0, %v397
    %v399 = vrot.slane %v388, %v398
    %v400 = vlaneseq
    %v401 = vshrl.u32 %v400, 7
    %v402 = vsub.s32 0, %v401
    %v403 = vrot.slane %v395, %v402
    %v406 = vadd.f32 %v399, %v190
    %v407 = vadd.f32 %v403, %v195
    %v408 = vtanh.pop %v406
    %v409 = vtanh.pop %v407
    %v411 = vlaneseq
    %v412 = vshrl.u32 %v411, 7
    %v413 = vsub.s32 0, %v412
    %v414 = vrot.slane %v103, %v413
    %v416 = vmul.f32 %v408, %v414
    %v417 = vmul.f32 %v409, %v414
    %v418 = vsel %vm116, %v416, 0.0
    %419 = vadd.xlane.f32.xlu0 %v418
    %v420 = vpop.xlane.xlu0 %419
    %v421 = vsel %vm116, %v417, 0.0
    %422 = vadd.xlane.f32.xlu0 %v421
    %v423 = vpop.xlane.xlu0 %422
    %v425 = vlaneseq
    %v426 = vshrl.u32 %v425, 7
    %v427 = vsub.s32 0, %v426
    %v428 = vrot.slane %v104, %v427
    %429 = vset.pattern.permute.xlu0 0
    %430 = vperm.xlu0 %429, %v428
    %v431 = vpop.permute.xlu0 %430
    %v433 = vadd.f32 %v420, %v431
    %v434 = vadd.f32 %v423, %v431
    %v437 = vlaneseq
    %v438 = vshrl.u32 %v437, 7
    %v439 = vsub.s32 %v199, %v438
    %v440 = vrot.slane %v433, %v439
    %v441 = vlaneseq
    %v442 = vshrl.u32 %v441, 7
    %v443 = vsub.s32 %v199, %v442
    %v444 = vrot.slane %v434, %v443
    %vm445 = vcmask 1041409
    %v446 = vsel %vm445, %v444, %v440
    %vm448 = vcmask 58368
    %v449 = vsel %vm448, %v446, -inf
    %450 = vmax.xlane.f32.xlu0 %v449
    %v451 = vpop.xlane.xlu0 %450
    %v453 = vlaneseq
    %v454 = vshrl.u32 %v453, 7
    %v455 = vsub.s32 0, %v454
    %v456 = vrot.slane %v451, %v455
    %v457 = vlaneseq
    %v458 = vshrl.u32 %v457, 7
    %v459 = vsub.s32 1, %v458
    %v460 = vrot.slane %v451, %v459
    %v463 = vsub.f32 %v433, %v456
    %v464 = vsub.f32 %v434, %v460
    %v465 = vmul.f32 %v463, 1.442695
    %v466 = vpow.pop %v465
    %v467 = vmul.f32 %v464, 1.442695
    %v468 = vpow.pop %v467
    %471 = vset.pattern.permute.xlu0 0
    %472 = vperm.xlu0 %471, %v466
    %v473 = vpop.permute.xlu0 %472
    %474 = vset.pattern.permute.xlu0 0
    %475 = vperm.xlu0 %474, %v468
    %v476 = vpop.permute.xlu0 %475
    %v477 = vlaneseq
    %v478 = vshrl.u32 %v477, 7
    %v479 = vsub.s32 %v199, %v478
    %v480 = vrot.slane %v473, %v479
    %v481 = vlaneseq
    %v482 = vshrl.u32 %v481, 7
    %v483 = vsub.s32 %v199, %v482
    %v484 = vrot.slane %v476, %v483
    %v485 = vsel %vm445, %v484, %v480
    %v487 = vsel %vm448, %v485, 0.0
    %488 = vadd.xlane.f32.xlu0 %v487
    %v489 = vpop.xlane.xlu0 %488
    %v490 = vlog2.pop %v489
    %v491 = vmul.f32 %v490, 0.6931472
    %v493 = vlaneseq
    %v494 = vshrl.u32 %v493, 7
    %v495 = vsub.s32 0, %v494
    %v496 = vrot.slane %v491, %v495
    %v497 = vlaneseq
    %v498 = vshrl.u32 %v497, 7
    %v499 = vsub.s32 1, %v498
    %v500 = vrot.slane %v491, %v499
    %v503 = vsub.f32 %v463, %v496
    %v504 = vsub.f32 %v464, %v500
    %vm505 = vcmp.eq.f32.partialorder %v433, %v456
    %vm506 = vcmp.eq.f32.partialorder %v434, %v460
    %508 = vbcast.lane.b32.xlu0 %v199, 256
    %v509 = vpop.permute.xlu0 %508
    %v510 = vsel %vm505, %v509, 8
    %v511 = vsel %vm506, %v509, 8
    %512 = vset.pattern.permute.xlu0 0
    %513 = vperm.xlu0 %512, %v510
    %v514 = vpop.permute.xlu0 %513
    %515 = vset.pattern.permute.xlu0 0
    %516 = vperm.xlu0 %515, %v511
    %v517 = vpop.permute.xlu0 %516
    %v518 = vlaneseq
    %v519 = vshrl.u32 %v518, 7
    %v520 = vsub.s32 %v199, %v519
    %v521 = vrot.slane %v514, %v520
    %v522 = vlaneseq
    %v523 = vshrl.u32 %v522, 7
    %v524 = vsub.s32 %v199, %v523
    %v525 = vrot.slane %v517, %v524
    %v526 = vsel %vm445, %v525, %v521
    %v527 = vsel %vm448, %v526, 2147483647
    %v528 = vand.u32 %v527, 65535
    %v529 = vshra.s32 %v527, 16
    %v530 = vcvt.s32.f32 %v528
    %v531 = vcvt.s32.f32 %v529
    %532 = vmin.xlane.f32.xlu0 %v531
    %v533 = vpop.xlane.xlu0 %532
    %vm534 = vcmp.eq.f32.partialorder %v531, %v533
    %v535 = vsel %vm534, %v530, inf
    %536 = vmin.xlane.f32.xlu0 %v535
    %v537 = vpop.xlane.xlu0 %536
    %v538 = vcvt.f32.s32 %v537
    %v539 = vcvt.f32.s32 %v533
    %v540 = vshll.u32 %v539, 16
    %v541 = vadd.s32 %v540, %v538
    %vm542 = vcmp.eq.s32.totalorder %v199, %v541
    %v543 = vsel %vm542, 1, 0
    %v544 = vcvt.s32.f32 %v543
    %v545 = vlaneseq
    %v546 = vshrl.u32 %v545, 7
    %v547 = vsub.s32 0, %v546
    %v548 = vrot.slane %v544, %v547
    %550 = vbcast.lane.b32.xlu0 %v548, 256
    %v551 = vpop.permute.xlu0 %550
    %v552 = vlaneseq
    %v553 = vshrl.u32 %v552, 7
    %v554 = vsub.s32 1, %v553
    %v555 = vrot.slane %v544, %v554
    %557 = vbcast.lane.b32.xlu0 %v555, 256
    %v558 = vpop.permute.xlu0 %557
    %v559 = vmul.f32 %v551, %v92
    %v560 = vmul.f32 %v558, %v93
    %v561 = vsel %vm116, %v559, 0.0
    %v562 = vrot.slane %v561, 4
    %v563 = vadd.f32 %v561, %v562
    %v564 = vrot.slane %v563, 2
    %v565 = vadd.f32 %v563, %v564
    %v566 = vrot.slane %v565, 1
    %v567 = vadd.f32 %v565, %v566
    %v568 = vsel %vm116, %v560, 0.0
    %v569 = vrot.slane %v568, 4
    %v570 = vadd.f32 %v568, %v569
    %v571 = vrot.slane %v570, 2
    %v572 = vadd.f32 %v570, %v571
    %v573 = vrot.slane %v572, 1
    %v574 = vadd.f32 %v572, %v573
    %v577 = vsel %vm445, %v574, %v567
    %v578 = vsel %vm116, %v577, 0
    %580 = vmatprep.subr.mxu0 0.0
    %581 = vmatpush1.msra.mxu0 %v94
    %582 = vmatprep.subr.mxu0 0.0
    %583 = vmatpush1.msra.mxu0 %v95
    %584 = vmatprep.subr.mxu0 0.0
    %585 = vmatpush1.msra.mxu0 %v96
    %586 = vmatprep.subr.mxu0 0.0
    %587 = vmatpush1.msra.mxu0 %v97
    %588 = vmatprep.subr.mxu0 0.0
    %589 = vmatpush1.msra.mxu0 0.0
    %590 = vmatprep.subr.mxu0 0.0
    %591 = vmatpush1.msra.mxu0 0.0
    %592 = vmatprep.subr.mxu0 0.0
    %593 = vmatpush1.msra.mxu0 0.0
    %594 = vmatprep.subr.mxu0 0.0
    %595 = vmatpush1.msra.mxu0 0.0
    %596 = vmatprep.subr.mxu0 0.0
    %597 = vmatpush1.msra.mxu0 0.0
    %598 = vmatprep.subr.mxu0 0.0
    %599 = vmatpush1.msra.mxu0 0.0
    %600 = vmatprep.subr.mxu0 0.0
    %601 = vmatpush1.msra.mxu0 0.0
    %602 = vmatprep.subr.mxu0 0.0
    %603 = vmatpush1.msra.mxu0 0.0
    %604 = vmatprep.subr.mxu0 0.0
    %605 = vmatpush1.msra.mxu0 0.0
    %606 = vmatprep.subr.mxu0 0.0
    %607 = vmatpush1.msra.mxu0 0.0
    %608 = vmatprep.subr.mxu0 0.0
    %609 = vmatpush1.msra.mxu0 0.0
    %610 = vmatprep.subr.mxu0 0.0
    %611 = vmatpush1.msra.mxu0 0.0
    %612 = vmatprep.subr.mxu0 0.0
    %613 = vmatpush1.msra.mxu0 0.0
    %614 = vmatprep.subr.mxu0 0.0
    %615 = vmatpush1.msra.mxu0 0.0
    %616 = vmatprep.subr.mxu0 0.0
    %617 = vmatpush1.msra.mxu0 0.0
    %618 = vmatprep.subr.mxu0 0.0
    %619 = vmatpush1.msra.mxu0 0.0
    %620 = vmatprep.subr.mxu0 0.0
    %621 = vmatpush1.msra.mxu0 0.0
    %622 = vmatprep.subr.mxu0 0.0
    %623 = vmatpush1.msra.mxu0 0.0
    %624 = vmatprep.subr.mxu0 0.0
    %625 = vmatpush1.msra.mxu0 0.0
    %626 = vmatprep.subr.mxu0 0.0
    %627 = vmatpush1.msra.mxu0 0.0
    %628 = vmatprep.subr.mxu0 0.0
    %629 = vmatpush1.msra.mxu0 0.0
    %630 = vmatprep.subr.mxu0 0.0
    %631 = vmatpush1.msra.mxu0 0.0
    %632 = vmatprep.subr.mxu0 0.0
    %633 = vmatpush1.msra.mxu0 0.0
    %634 = vmatprep.subr.mxu0 0.0
    %635 = vmatpush1.msra.mxu0 0.0
    %636 = vmatprep.subr.mxu0 0.0
    %637 = vmatpush1.msra.mxu0 0.0
    %638 = vmatprep.subr.mxu0 0.0
    %639 = vmatpush1.msra.mxu0 0.0
    %640 = vmatprep.subr.mxu0 0.0
    %641 = vmatpush1.msra.mxu0 0.0
    %642 = vmatprep.subr.mxu0 0.0
    %643 = vmatpush1.msra.mxu0 0.0
    %644 = vmatprep.mubr.f32.mxu0 0.0
    %645 = vmatmul.mubr.f32.gmra.mrb[0].mxu0 %v578
    %v646 = vpop.f32.mrb[0].mxu0
    %v647 = vadd.f32 %v205, %v646
    %v648 = vpop.f32.mrb[0].mxu0
    %649 = vdwg.mxu0
    %v650 = vxor.u32 %v647, 2147483648
    %v651 = vmul.f32 %v650, 1.442695
    %v652 = vpow.pop %v651
    %v653 = vadd.f32 %v652, 1.0
    %v654 = vrcp.pop %v653
    %v655 = vmul.f32 1.0, %v654
    %v656 = vtanh.pop %v647
    %658 = vrot.lane.b32.xlu0 %v656, 96
    %v659 = vpop.permute.xlu0 %658
    %v661 = vmul.f32 %v655, %v659
    %v662 = vtanh.pop %v661
    %664 = vrot.lane.b32.xlu0 %v662, 64
    %v665 = vpop.permute.xlu0 %664
    %v667 = vmul.f32 %v655, %v665
    %669 = vrot.lane.b32.xlu0 %v667, 64
    %v670 = vpop.permute.xlu0 %669
    %v671 = vsel %vm116, %v670, 0
    %673 = vmatprep.subr.mxu0 0.0
    %674 = vmatpush1.msra.mxu0 %v99
    %675 = vmatprep.subr.mxu0 0.0
    %676 = vmatpush1.msra.mxu0 %v100
    %677 = vmatprep.subr.mxu0 0.0
    %678 = vmatpush1.msra.mxu0 %v101
    %679 = vmatprep.subr.mxu0 0.0
    %680 = vmatpush1.msra.mxu0 %v102
    %681 = vmatprep.subr.mxu0 0.0
    %682 = vmatpush1.msra.mxu0 0.0
    %683 = vmatprep.subr.mxu0 0.0
    %684 = vmatpush1.msra.mxu0 0.0
    %685 = vmatprep.subr.mxu0 0.0
    %686 = vmatpush1.msra.mxu0 0.0
    %687 = vmatprep.subr.mxu0 0.0
    %688 = vmatpush1.msra.mxu0 0.0
    %689 = vmatprep.subr.mxu0 0.0
    %690 = vmatpush1.msra.mxu0 0.0
    %691 = vmatprep.subr.mxu0 0.0
    %692 = vmatpush1.msra.mxu0 0.0
    %693 = vmatprep.subr.mxu0 0.0
    %694 = vmatpush1.msra.mxu0 0.0
    %695 = vmatprep.subr.mxu0 0.0
    %696 = vmatpush1.msra.mxu0 0.0
    %697 = vmatprep.subr.mxu0 0.0
    %698 = vmatpush1.msra.mxu0 0.0
    %699 = vmatprep.subr.mxu0 0.0
    %700 = vmatpush1.msra.mxu0 0.0
    %701 = vmatprep.subr.mxu0 0.0
    %702 = vmatpush1.msra.mxu0 0.0
    %703 = vmatprep.subr.mxu0 0.0
    %704 = vmatpush1.msra.mxu0 0.0
    %705 = vmatprep.subr.mxu0 0.0
    %706 = vmatpush1.msra.mxu0 0.0
    %707 = vmatprep.subr.mxu0 0.0
    %708 = vmatpush1.msra.mxu0 0.0
    %709 = vmatprep.subr.mxu0 0.0
    %710 = vmatpush1.msra.mxu0 0.0
    %711 = vmatprep.subr.mxu0 0.0
    %712 = vmatpush1.msra.mxu0 0.0
    %713 = vmatprep.subr.mxu0 0.0
    %714 = vmatpush1.msra.mxu0 0.0
    %715 = vmatprep.subr.mxu0 0.0
    %716 = vmatpush1.msra.mxu0 0.0
    %717 = vmatprep.subr.mxu0 0.0
    %718 = vmatpush1.msra.mxu0 0.0
    %719 = vmatprep.subr.mxu0 0.0
    %720 = vmatpush1.msra.mxu0 0.0
    %721 = vmatprep.subr.mxu0 0.0
    %722 = vmatpush1.msra.mxu0 0.0
    %723 = vmatprep.subr.mxu0 0.0
    %724 = vmatpush1.msra.mxu0 0.0
    %725 = vmatprep.subr.mxu0 0.0
    %726 = vmatpush1.msra.mxu0 0.0
    %727 = vmatprep.subr.mxu0 0.0
    %728 = vmatpush1.msra.mxu0 0.0
    %729 = vmatprep.subr.mxu0 0.0
    %730 = vmatpush1.msra.mxu0 0.0
    %731 = vmatprep.subr.mxu0 0.0
    %732 = vmatpush1.msra.mxu0 0.0
    %733 = vmatprep.subr.mxu0 0.0
    %734 = vmatpush1.msra.mxu0 0.0
    %735 = vmatprep.subr.mxu0 0.0
    %736 = vmatpush1.msra.mxu0 0.0
    %737 = vmatprep.mubr.f32.mxu0 0.0
    %738 = vmatmul.mubr.f32.gmra.mrb[0].mxu0 %v671
    %v739 = vpop.f32.mrb[0].mxu0
    %v740 = vadd.f32 0.0, %v739
    %v741 = vpop.f32.mrb[0].mxu0
    %742 = vdwg.mxu0
    %v745 = vunpack.c.l.s4 1966171168
    %v746 = vunpack.c.0.s8 %v745
    %v747 = vlaneseq
    %v748 = vshrl.u32 %v747, 7
    %v749 = vsub.s32 %v746, %v748
    %v750 = vrot.slane %v740, %v749
    %v751 = vcombine.high %v750, %v750
    %v753 = vunpack.c.l.s4 1966171168
    %v754 = vunpack.c.0.s8 %v753
    %v755 = vlaneseq
    %v756 = vshrl.u32 %v755, 7
    %v757 = vsub.s32 %v754, %v756
    %v758 = vrot.slane %v750, %v757
    %v760 = vunpack.c.l.s4 1966171168
    %v761 = vunpack.c.0.s8 %v760
    %v762 = vlaneseq
    %v763 = vshrl.u32 %v762, 7
    %v764 = vsub.s32 %v761, %v763
    %v765 = vrot.slane %v751, %v764
    %v766 = vlaneseq
    %v767 = vshrl.u32 %v766, 7
    %v768 = vsub.s32 0, %v767
    %v769 = vrot.slane %v758, %v768
    %v770 = vlaneseq
    %v771 = vshrl.u32 %v770, 7
    %v772 = vsub.s32 0, %v771
    %v773 = vrot.slane %v765, %v772
    %v776 = vadd.f32 %v769, %v190
    %v777 = vadd.f32 %v773, %v195
    %v778 = vtanh.pop %v776
    %v779 = vtanh.pop %v777
    %v780 = vmul.f32 %v778, %v414
    %v781 = vmul.f32 %v779, %v414
    %v782 = vsel %vm116, %v780, 0.0
    %783 = vadd.xlane.f32.xlu0 %v782
    %v784 = vpop.xlane.xlu0 %783
    %v785 = vsel %vm116, %v781, 0.0
    %786 = vadd.xlane.f32.xlu0 %v785
    %v787 = vpop.xlane.xlu0 %786
    %v788 = vadd.f32 %v784, %v431
    %v789 = vadd.f32 %v787, %v431
    %v792 = vlaneseq
    %v793 = vshrl.u32 %v792, 7
    %v794 = vsub.s32 %v199, %v793
    %v795 = vrot.slane %v788, %v794
    %v796 = vlaneseq
    %v797 = vshrl.u32 %v796, 7
    %v798 = vsub.s32 %v199, %v797
    %v799 = vrot.slane %v789, %v798
    %v800 = vsel %vm445, %v799, %v795
    %v802 = vsel %vm448, %v800, -inf
    %803 = vmax.xlane.f32.xlu0 %v802
    %v804 = vpop.xlane.xlu0 %803
    %v806 = vlaneseq
    %v807 = vshrl.u32 %v806, 7
    %v808 = vsub.s32 0, %v807
    %v809 = vrot.slane %v804, %v808
    %v810 = vlaneseq
    %v811 = vshrl.u32 %v810, 7
    %v812 = vsub.s32 1, %v811
    %v813 = vrot.slane %v804, %v812
    %v816 = vsub.f32 %v788, %v809
    %v817 = vsub.f32 %v789, %v813
    %v818 = vmul.f32 %v816, 1.442695
    %v819 = vpow.pop %v818
    %v820 = vmul.f32 %v817, 1.442695
    %v821 = vpow.pop %v820
    %824 = vset.pattern.permute.xlu0 0
    %825 = vperm.xlu0 %824, %v819
    %v826 = vpop.permute.xlu0 %825
    %827 = vset.pattern.permute.xlu0 0
    %828 = vperm.xlu0 %827, %v821
    %v829 = vpop.permute.xlu0 %828
    %v830 = vlaneseq
    %v831 = vshrl.u32 %v830, 7
    %v832 = vsub.s32 %v199, %v831
    %v833 = vrot.slane %v826, %v832
    %v834 = vlaneseq
    %v835 = vshrl.u32 %v834, 7
    %v836 = vsub.s32 %v199, %v835
    %v837 = vrot.slane %v829, %v836
    %v838 = vsel %vm445, %v837, %v833
    %v840 = vsel %vm448, %v838, 0.0
    %841 = vadd.xlane.f32.xlu0 %v840
    %v842 = vpop.xlane.xlu0 %841
    %v843 = vlog2.pop %v842
    %v844 = vmul.f32 %v843, 0.6931472
    %v846 = vlaneseq
    %v847 = vshrl.u32 %v846, 7
    %v848 = vsub.s32 0, %v847
    %v849 = vrot.slane %v844, %v848
    %v850 = vlaneseq
    %v851 = vshrl.u32 %v850, 7
    %v852 = vsub.s32 1, %v851
    %v853 = vrot.slane %v844, %v852
    %v856 = vsub.f32 %v816, %v849
    %v857 = vsub.f32 %v817, %v853
    %vm858 = vcmp.eq.f32.partialorder %v788, %v809
    %vm859 = vcmp.eq.f32.partialorder %v789, %v813
    %v860 = vsel %vm858, %v509, 8
    %v861 = vsel %vm859, %v509, 8
    %862 = vset.pattern.permute.xlu0 0
    %863 = vperm.xlu0 %862, %v860
    %v864 = vpop.permute.xlu0 %863
    %865 = vset.pattern.permute.xlu0 0
    %866 = vperm.xlu0 %865, %v861
    %v867 = vpop.permute.xlu0 %866
    %v868 = vlaneseq
    %v869 = vshrl.u32 %v868, 7
    %v870 = vsub.s32 %v199, %v869
    %v871 = vrot.slane %v864, %v870
    %v872 = vlaneseq
    %v873 = vshrl.u32 %v872, 7
    %v874 = vsub.s32 %v199, %v873
    %v875 = vrot.slane %v867, %v874
    %v876 = vsel %vm445, %v875, %v871
    %v877 = vsel %vm448, %v876, 2147483647
    %v878 = vand.u32 %v877, 65535
    %v879 = vshra.s32 %v877, 16
    %v880 = vcvt.s32.f32 %v878
    %v881 = vcvt.s32.f32 %v879
    %882 = vmin.xlane.f32.xlu0 %v881
    %v883 = vpop.xlane.xlu0 %882
    %vm884 = vcmp.eq.f32.partialorder %v881, %v883
    %v885 = vsel %vm884, %v880, inf
    %886 = vmin.xlane.f32.xlu0 %v885
    %v887 = vpop.xlane.xlu0 %886
    %v888 = vcvt.f32.s32 %v887
    %v889 = vcvt.f32.s32 %v883
    %v890 = vshll.u32 %v889, 16
    %v891 = vadd.s32 %v890, %v888
    %vm892 = vcmp.eq.s32.totalorder %v199, %v891
    %v893 = vsel %vm892, 1, 0
    %v894 = vcvt.s32.f32 %v893
    %v895 = vlaneseq
    %v896 = vshrl.u32 %v895, 7
    %v897 = vsub.s32 0, %v896
    %v898 = vrot.slane %v894, %v897
    %900 = vbcast.lane.b32.xlu0 %v898, 256
    %v901 = vpop.permute.xlu0 %900
    %v902 = vlaneseq
    %v903 = vshrl.u32 %v902, 7
    %v904 = vsub.s32 1, %v903
    %v905 = vrot.slane %v894, %v904
    %907 = vbcast.lane.b32.xlu0 %v905, 256
    %v908 = vpop.permute.xlu0 %907
    %v909 = vmul.f32 %v901, %v92
    %v910 = vmul.f32 %v908, %v93
    %v911 = vsel %vm116, %v909, 0.0
    %v912 = vrot.slane %v911, 4
    %v913 = vadd.f32 %v911, %v912
    %v914 = vrot.slane %v913, 2
    %v915 = vadd.f32 %v913, %v914
    %v916 = vrot.slane %v915, 1
    %v917 = vadd.f32 %v915, %v916
    %v918 = vsel %vm116, %v910, 0.0
    %v919 = vrot.slane %v918, 4
    %v920 = vadd.f32 %v918, %v919
    %v921 = vrot.slane %v920, 2
    %v922 = vadd.f32 %v920, %v921
    %v923 = vrot.slane %v922, 1
    %v924 = vadd.f32 %v922, %v923
    %v927 = vsel %vm445, %v924, %v917
    %v928 = vsel %vm116, %v927, 0
    %930 = vmatprep.subr.mxu0 0.0
    %931 = vmatpush1.msra.mxu0 %v94
    %932 = vmatprep.subr.mxu0 0.0
    %933 = vmatpush1.msra.mxu0 %v95
    %934 = vmatprep.subr.mxu0 0.0
    %935 = vmatpush1.msra.mxu0 %v96
    %936 = vmatprep.subr.mxu0 0.0
    %937 = vmatpush1.msra.mxu0 %v97
    %938 = vmatprep.subr.mxu0 0.0
    %939 = vmatpush1.msra.mxu0 0.0
    %940 = vmatprep.subr.mxu0 0.0
    %941 = vmatpush1.msra.mxu0 0.0
    %942 = vmatprep.subr.mxu0 0.0
    %943 = vmatpush1.msra.mxu0 0.0
    %944 = vmatprep.subr.mxu0 0.0
    %945 = vmatpush1.msra.mxu0 0.0
    %946 = vmatprep.subr.mxu0 0.0
    %947 = vmatpush1.msra.mxu0 0.0
    %948 = vmatprep.subr.mxu0 0.0
    %949 = vmatpush1.msra.mxu0 0.0
    %950 = vmatprep.subr.mxu0 0.0
    %951 = vmatpush1.msra.mxu0 0.0
    %952 = vmatprep.subr.mxu0 0.0
    %953 = vmatpush1.msra.mxu0 0.0
    %954 = vmatprep.subr.mxu0 0.0
    %955 = vmatpush1.msra.mxu0 0.0
    %956 = vmatprep.subr.mxu0 0.0
    %957 = vmatpush1.msra.mxu0 0.0
    %958 = vmatprep.subr.mxu0 0.0
    %959 = vmatpush1.msra.mxu0 0.0
    %960 = vmatprep.subr.mxu0 0.0
    %961 = vmatpush1.msra.mxu0 0.0
    %962 = vmatprep.subr.mxu0 0.0
    %963 = vmatpush1.msra.mxu0 0.0
    %964 = vmatprep.subr.mxu0 0.0
    %965 = vmatpush1.msra.mxu0 0.0
    %966 = vmatprep.subr.mxu0 0.0
    %967 = vmatpush1.msra.mxu0 0.0
    %968 = vmatprep.subr.mxu0 0.0
    %969 = vmatpush1.msra.mxu0 0.0
    %970 = vmatprep.subr.mxu0 0.0
    %971 = vmatpush1.msra.mxu0 0.0
    %972 = vmatprep.subr.mxu0 0.0
    %973 = vmatpush1.msra.mxu0 0.0
    %974 = vmatprep.subr.mxu0 0.0
    %975 = vmatpush1.msra.mxu0 0.0
    %976 = vmatprep.subr.mxu0 0.0
    %977 = vmatpush1.msra.mxu0 0.0
    %978 = vmatprep.subr.mxu0 0.0
    %979 = vmatpush1.msra.mxu0 0.0
    %980 = vmatprep.subr.mxu0 0.0
    %981 = vmatpush1.msra.mxu0 0.0
    %982 = vmatprep.subr.mxu0 0.0
    %983 = vmatpush1.msra.mxu0 0.0
    %984 = vmatprep.subr.mxu0 0.0
    %985 = vmatpush1.msra.mxu0 0.0
    %986 = vmatprep.subr.mxu0 0.0
    %987 = vmatpush1.msra.mxu0 0.0
    %988 = vmatprep.subr.mxu0 0.0
    %989 = vmatpush1.msra.mxu0 0.0
    %990 = vmatprep.subr.mxu0 0.0
    %991 = vmatpush1.msra.mxu0 0.0
    %992 = vmatprep.subr.mxu0 0.0
    %993 = vmatpush1.msra.mxu0 0.0
    %994 = vmatprep.mubr.f32.mxu0 0.0
    %995 = vmatmul.mubr.f32.gmra.mrb[0].mxu0 %v928
    %v996 = vpop.f32.mrb[0].mxu0
    %v997 = vadd.f32 %v205, %v996
    %v998 = vpop.f32.mrb[0].mxu0
    %999 = vdwg.mxu0
    %v1000 = vxor.u32 %v997, 2147483648
    %v1001 = vmul.f32 %v1000, 1.442695
    %v1002 = vpow.pop %v1001
    %v1003 = vadd.f32 %v1002, 1.0
    %v1004 = vrcp.pop %v1003
    %v1005 = vmul.f32 1.0, %v1004
    %v1006 = vtanh.pop %v997
    %1008 = vrot.lane.b32.xlu0 %v1006, 96
    %v1009 = vpop.permute.xlu0 %1008
    %v1011 = vmul.f32 %v1005, %v1009
    %v1012 = vtanh.pop %v1011
    %1014 = vrot.lane.b32.xlu0 %v1012, 64
    %v1015 = vpop.permute.xlu0 %1014
    %v1017 = vmul.f32 %v1005, %v1015
    %1019 = vrot.lane.b32.xlu0 %v1017, 64
    %v1020 = vpop.permute.xlu0 %1019
    %v1021 = vsel %vm116, %v1020, 0
    %1023 = vmatprep.subr.mxu0 0.0
    %1024 = vmatpush1.msra.mxu0 %v99
    %1025 = vmatprep.subr.mxu0 0.0
    %1026 = vmatpush1.msra.mxu0 %v100
    %1027 = vmatprep.subr.mxu0 0.0
    %1028 = vmatpush1.msra.mxu0 %v101
    %1029 = vmatprep.subr.mxu0 0.0
    %1030 = vmatpush1.msra.mxu0 %v102
    %1031 = vmatprep.subr.mxu0 0.0
    %1032 = vmatpush1.msra.mxu0 0.0
    %1033 = vmatprep.subr.mxu0 0.0
    %1034 = vmatpush1.msra.mxu0 0.0
    %1035 = vmatprep.subr.mxu0 0.0
    %1036 = vmatpush1.msra.mxu0 0.0
    %1037 = vmatprep.subr.mxu0 0.0
    %1038 = vmatpush1.msra.mxu0 0.0
    %1039 = vmatprep.subr.mxu0 0.0
    %1040 = vmatpush1.msra.mxu0 0.0
    %1041 = vmatprep.subr.mxu0 0.0
    %1042 = vmatpush1.msra.mxu0 0.0
    %1043 = vmatprep.subr.mxu0 0.0
    %1044 = vmatpush1.msra.mxu0 0.0
    %1045 = vmatprep.subr.mxu0 0.0
    %1046 = vmatpush1.msra.mxu0 0.0
    %1047 = vmatprep.subr.mxu0 0.0
    %1048 = vmatpush1.msra.mxu0 0.0
    %1049 = vmatprep.subr.mxu0 0.0
    %1050 = vmatpush1.msra.mxu0 0.0
    %1051 = vmatprep.subr.mxu0 0.0
    %1052 = vmatpush1.msra.mxu0 0.0
    %1053 = vmatprep.subr.mxu0 0.0
    %1054 = vmatpush1.msra.mxu0 0.0
    %1055 = vmatprep.subr.mxu0 0.0
    %1056 = vmatpush1.msra.mxu0 0.0
    %1057 = vmatprep.subr.mxu0 0.0
    %1058 = vmatpush1.msra.mxu0 0.0
    %1059 = vmatprep.subr.mxu0 0.0
    %1060 = vmatpush1.msra.mxu0 0.0
    %1061 = vmatprep.subr.mxu0 0.0
    %1062 = vmatpush1.msra.mxu0 0.0
    %1063 = vmatprep.subr.mxu0 0.0
    %1064 = vmatpush1.msra.mxu0 0.0
    %1065 = vmatprep.subr.mxu0 0.0
    %1066 = vmatpush1.msra.mxu0 0.0
    %1067 = vmatprep.subr.mxu0 0.0
    %1068 = vmatpush1.msra.mxu0 0.0
    %1069 = vmatprep.subr.mxu0 0.0
    %1070 = vmatpush1.msra.mxu0 0.0
    %1071 = vmatprep.subr.mxu0 0.0
    %1072 = vmatpush1.msra.mxu0 0.0
    %1073 = vmatprep.subr.mxu0 0.0
    %1074 = vmatpush1.msra.mxu0 0.0
    %1075 = vmatprep.subr.mxu0 0.0
    %1076 = vmatpush1.msra.mxu0 0.0
    %1077 = vmatprep.subr.mxu0 0.0
    %1078 = vmatpush1.msra.mxu0 0.0
    %1079 = vmatprep.subr.mxu0 0.0
    %1080 = vmatpush1.msra.mxu0 0.0
    %1081 = vmatprep.subr.mxu0 0.0
    %1082 = vmatpush1.msra.mxu0 0.0
    %1083 = vmatprep.subr.mxu0 0.0
    %1084 = vmatpush1.msra.mxu0 0.0
    %1085 = vmatprep.subr.mxu0 0.0
    %1086 = vmatpush1.msra.mxu0 0.0
    %1087 = vmatprep.mubr.f32.mxu0 0.0
    %1088 = vmatmul.mubr.f32.gmra.mrb[0].mxu0 %v1021
    %v1089 = vpop.f32.mrb[0].mxu0
    %v1090 = vadd.f32 0.0, %v1089
    %v1091 = vpop.f32.mrb[0].mxu0
    %1092 = vdwg.mxu0
    %v1095 = vunpack.c.l.s4 1966171168
    %v1096 = vunpack.c.0.s8 %v1095
    %v1097 = vlaneseq
    %v1098 = vshrl.u32 %v1097, 7
    %v1099 = vsub.s32 %v1096, %v1098
    %v1100 = vrot.slane %v1090, %v1099
    %v1101 = vcombine.high %v1100, %v1100
    %v1103 = vunpack.c.l.s4 1966171168
    %v1104 = vunpack.c.0.s8 %v1103
    %v1105 = vlaneseq
    %v1106 = vshrl.u32 %v1105, 7
    %v1107 = vsub.s32 %v1104, %v1106
    %v1108 = vrot.slane %v1100, %v1107
    %v1110 = vunpack.c.l.s4 1966171168
    %v1111 = vunpack.c.0.s8 %v1110
    %v1112 = vlaneseq
    %v1113 = vshrl.u32 %v1112, 7
    %v1114 = vsub.s32 %v1111, %v1113
    %v1115 = vrot.slane %v1101, %v1114
    %v1116 = vlaneseq
    %v1117 = vshrl.u32 %v1116, 7
    %v1118 = vsub.s32 0, %v1117
    %v1119 = vrot.slane %v1108, %v1118
    %v1120 = vlaneseq
    %v1121 = vshrl.u32 %v1120, 7
    %v1122 = vsub.s32 0, %v1121
    %v1123 = vrot.slane %v1115, %v1122
    %v1126 = vadd.f32 %v1119, %v190
    %v1127 = vadd.f32 %v1123, %v195
    %v1128 = vtanh.pop %v1126
    %v1129 = vtanh.pop %v1127
    %v1130 = vmul.f32 %v1128, %v414
    %v1131 = vmul.f32 %v1129, %v414
    %v1132 = vsel %vm116, %v1130, 0.0
    %1133 = vadd.xlane.f32.xlu0 %v1132
    %v1134 = vpop.xlane.xlu0 %1133
    %v1135 = vsel %vm116, %v1131, 0.0
    %1136 = vadd.xlane.f32.xlu0 %v1135
    %v1137 = vpop.xlane.xlu0 %1136
    %v1138 = vadd.f32 %v1134, %v431
    %v1139 = vadd.f32 %v1137, %v431
    %v1142 = vlaneseq
    %v1143 = vshrl.u32 %v1142, 7
    %v1144 = vsub.s32 %v199, %v1143
    %v1145 = vrot.slane %v1138, %v1144
    %v1146 = vlaneseq
    %v1147 = vshrl.u32 %v1146, 7
    %v1148 = vsub.s32 %v199, %v1147
    %v1149 = vrot.slane %v1139, %v1148
    %v1150 = vsel %vm445, %v1149, %v1145
    %v1152 = vsel %vm448, %v1150, -inf
    %1153 = vmax.xlane.f32.xlu0 %v1152
    %v1154 = vpop.xlane.xlu0 %1153
    %v1156 = vlaneseq
    %v1157 = vshrl.u32 %v1156, 7
    %v1158 = vsub.s32 0, %v1157
    %v1159 = vrot.slane %v1154, %v1158
    %v1160 = vlaneseq
    %v1161 = vshrl.u32 %v1160, 7
    %v1162 = vsub.s32 1, %v1161
    %v1163 = vrot.slane %v1154, %v1162
    %v1166 = vsub.f32 %v1138, %v1159
    %v1167 = vsub.f32 %v1139, %v1163
    %v1168 = vmul.f32 %v1166, 1.442695
    %v1169 = vpow.pop %v1168
    %v1170 = vmul.f32 %v1167, 1.442695
    %v1171 = vpow.pop %v1170
    %1174 = vset.pattern.permute.xlu0 0
    %1175 = vperm.xlu0 %1174, %v1169
    %v1176 = vpop.permute.xlu0 %1175
    %1177 = vset.pattern.permute.xlu0 0
    %1178 = vperm.xlu0 %1177, %v1171
    %v1179 = vpop.permute.xlu0 %1178
    %v1180 = vlaneseq
    %v1181 = vshrl.u32 %v1180, 7
    %v1182 = vsub.s32 %v199, %v1181
    %v1183 = vrot.slane %v1176, %v1182
    %v1184 = vlaneseq
    %v1185 = vshrl.u32 %v1184, 7
    %v1186 = vsub.s32 %v199, %v1185
    %v1187 = vrot.slane %v1179, %v1186
    %v1188 = vsel %vm445, %v1187, %v1183
    %v1190 = vsel %vm448, %v1188, 0.0
    %1191 = vadd.xlane.f32.xlu0 %v1190
    %v1192 = vpop.xlane.xlu0 %1191
    %v1193 = vlog2.pop %v1192
    %v1194 = vmul.f32 %v1193, 0.6931472
    %v1196 = vlaneseq
    %v1197 = vshrl.u32 %v1196, 7
    %v1198 = vsub.s32 0, %v1197
    %v1199 = vrot.slane %v1194, %v1198
    %v1200 = vlaneseq
    %v1201 = vshrl.u32 %v1200, 7
    %v1202 = vsub.s32 1, %v1201
    %v1203 = vrot.slane %v1194, %v1202
    %v1206 = vsub.f32 %v1166, %v1199
    %v1207 = vsub.f32 %v1167, %v1203
    %vm1208 = vcmp.eq.f32.partialorder %v1138, %v1159
    %vm1209 = vcmp.eq.f32.partialorder %v1139, %v1163
    %v1210 = vsel %vm1208, %v509, 8
    %v1211 = vsel %vm1209, %v509, 8
    %1212 = vset.pattern.permute.xlu0 0
    %1213 = vperm.xlu0 %1212, %v1210
    %v1214 = vpop.permute.xlu0 %1213
    %1215 = vset.pattern.permute.xlu0 0
    %1216 = vperm.xlu0 %1215, %v1211
    %v1217 = vpop.permute.xlu0 %1216
    %v1218 = vlaneseq
    %v1219 = vshrl.u32 %v1218, 7
    %v1220 = vsub.s32 %v199, %v1219
    %v1221 = vrot.slane %v1214, %v1220
    %v1222 = vlaneseq
    %v1223 = vshrl.u32 %v1222, 7
    %v1224 = vsub.s32 %v199, %v1223
    %v1225 = vrot.slane %v1217, %v1224
    %v1226 = vsel %vm445, %v1225, %v1221
    %v1227 = vsel %vm448, %v1226, 2147483647
    %v1228 = vand.u32 %v1227, 65535
    %v1229 = vshra.s32 %v1227, 16
    %v1230 = vcvt.s32.f32 %v1228
    %v1231 = vcvt.s32.f32 %v1229
    %1232 = vmin.xlane.f32.xlu0 %v1231
    %v1233 = vpop.xlane.xlu0 %1232
    %vm1234 = vcmp.eq.f32.partialorder %v1231, %v1233
    %v1235 = vsel %vm1234, %v1230, inf
    %1236 = vmin.xlane.f32.xlu0 %v1235
    %v1237 = vpop.xlane.xlu0 %1236
    %v1238 = vcvt.f32.s32 %v1237
    %v1239 = vcvt.f32.s32 %v1233
    %v1240 = vshll.u32 %v1239, 16
    %v1241 = vadd.s32 %v1240, %v1238
    %1244 = vset.pattern.permute.xlu0 0
    %1245 = vperm.xlu0 %1244, %v503
    %v1246 = vpop.permute.xlu0 %1245
    %1247 = vset.pattern.permute.xlu0 0
    %1248 = vperm.xlu0 %1247, %v504
    %v1249 = vpop.permute.xlu0 %1248
    %v1250 = vlaneseq
    %v1251 = vshrl.u32 %v1250, 7
    %v1252 = vsub.s32 %v199, %v1251
    %v1253 = vrot.slane %v1246, %v1252
    %v1254 = vlaneseq
    %v1255 = vshrl.u32 %v1254, 7
    %v1256 = vsub.s32 %v199, %v1255
    %v1257 = vrot.slane %v1249, %v1256
    %1262 = vset.pattern.permute.xlu0 0
    %1263 = vperm.xlu0 %1262, %v856
    %v1264 = vpop.permute.xlu0 %1263
    %1265 = vset.pattern.permute.xlu0 0
    %1266 = vperm.xlu0 %1265, %v857
    %v1267 = vpop.permute.xlu0 %1266
    %v1268 = vlaneseq
    %v1269 = vshrl.u32 %v1268, 7
    %v1270 = vsub.s32 %v199, %v1269
    %v1271 = vrot.slane %v1264, %v1270
    %v1272 = vlaneseq
    %v1273 = vshrl.u32 %v1272, 7
    %v1274 = vsub.s32 %v199, %v1273
    %v1275 = vrot.slane %v1267, %v1274
    %1280 = vset.pattern.permute.xlu0 0
    %1281 = vperm.xlu0 %1280, %v1206
    %v1282 = vpop.permute.xlu0 %1281
    %1283 = vset.pattern.permute.xlu0 0
    %1284 = vperm.xlu0 %1283, %v1207
    %v1285 = vpop.permute.xlu0 %1284
    %v1286 = vlaneseq
    %v1287 = vshrl.u32 %v1286, 7
    %v1288 = vsub.s32 %v199, %v1287
    %v1289 = vrot.slane %v1282, %v1288
    %v1290 = vlaneseq
    %v1291 = vshrl.u32 %v1290, 7
    %v1292 = vsub.s32 %v199, %v1291
    %v1293 = vrot.slane %v1285, %v1292
    %vm1296 = vcmask 1040384
    %v1297 = vsel %vm1296, %v1253, %v1271
    %v1298 = vsel %vm1296, %v1257, %v1275
    %vm1299 = vcmask 1041408
    %v1300 = vsel %vm1299, %v1297, %v1289
    %v1301 = vsel %vm1299, %v1298, %v1293
    %vm1302 = vcmask 59392
    %1303 = vst.msk [vmem:[%s9] sm:$0x7] %vm1302, %v1300
    %1304 = vst.msk [vmem:[%s9 + $0x4] sm:$0x7] %vm1302, %v1301
    %vm1305 = vcmask 7168
    %v1306 = vsel %vm1305, %v541, %v891
    %vm1307 = vcmask 15360
    %v1308 = vsel %vm1307, %v1306, %v1241
    %vm1309 = vcmask 17408
    %1310 = vst.msk [vmem:[#allocation11] sm:$0x3] %vm1309, %v1308
    // Predicated region
    $region54: #{tpu_custom_call.1} parent=1 // pred_check
      _
    $region55: #{tpu_custom_call.1} parent=1 // pred_check_branch
      %1312 = sbr.rel (0) target = $region57
    $region56: #{tpu_custom_call.1} parent=1 // pred_region
      _
    $region57: #{tpu_custom_call.1} parent=1 // pred_fallthru
      _
    // Predicated region
    $region58: #{tpu_custom_call.1} parent=1 // pred_check
      _
    $region59: #{tpu_custom_call.1} parent=1 // pred_check_branch
      %1314 = sbr.rel (0) target = $region61
    $region60: #{tpu_custom_call.1} parent=1 // pred_region
      %s1316 = ssub.s32 32, 32
      %1317 = vsyncadd [#allocation5], %s1316
      %s1319 = sshll.u32 [#allocation11], 4
      %s1320 = int_to_ptr.vmem [resolvable:$true] %s1319
      %1322 = dma.vmem_to_hbm [thread:$0]  %s1320, 32, %s10, [#allocation5]
    $region61: #{tpu_custom_call.1} parent=1 // pred_fallthru
      _
    // Predicated region
    $region62: #{tpu_custom_call.1} parent=1 // pred_check
      _
    $region63: #{tpu_custom_call.1} parent=1 // pred_check_branch
      %1324 = sbr.rel (0) target = $region65
    $region64: #{tpu_custom_call.1} parent=1 // pred_region
      _
    $region65: #{tpu_custom_call.1} parent=1 // pred_fallthru
      _
    // Predicated region
    $region66: #{tpu_custom_call.1} parent=1 // pred_check
      _
    $region67: #{tpu_custom_call.1} parent=1 // pred_check_branch
      %1326 = sbr.rel (0) target = $region69
    $region68: #{tpu_custom_call.1} parent=1 // pred_region
      %1327 = dma.done [#allocation5], 32
    $region69: #{tpu_custom_call.1} parent=1 // pred_fallthru
      _
    %1328 = vsyncpa [#allocation4], 1
    %1329 = vsyncpa [#allocation7], 1
    %1330 = vsyncpa [#allocation10], 1
    %1331 = vsyncpa [#allocation5], 1

</llo_original>
